<compile_context>
chip_gen: v5e
topology: v5e:2x2
jax: 0.10.0
libtpu: 0.0.40
codegen_flags: <defaults>
</compile_context>

<pallas_src>
import functools

import jax
import jax.numpy as jnp
from jax.experimental import pallas as pl
from jax.experimental.pallas import tpu as pltpu


def fast_attention_kernel(x_ref, mask_ref, expand_ref,
                          wqk_ref, wqa_ref, wka_ref, wt_ref, wo_ref, bias_ref,
                          o_ref, wv_scratch,
                          *, num_heads, head_dim, seq_len, block_b, eps):
    nh = num_heads
    H = nh * head_dim
    S = seq_len
    scale = 1.0 / (head_dim ** 0.5)
    f32 = jnp.float32
    bf16 = jnp.bfloat16

    # Small constants / packed parameters (resident in VMEM, f32).
    expand = expand_ref[...]                       # (nh, H) head-selection mask
    b_all = bias_ref[...]                          # (8, H) packed biases / LN
    bq, bk = b_all[0:1, :], b_all[1:2, :]
    bqa, bka = b_all[2:3, :nh], b_all[3:4, :nh]
    bt, bo = b_all[4:5, :], b_all[5:6, :]
    gamma, beta = b_all[6:7, :], b_all[7:8, :]

    x_bf = x_ref[...]                              # (block_b*S, H) bf16
    mask = mask_ref[...]                           # (block_b*S, nh) f32

    # Fused query/key projection: one MXU pass with N = 2H, f32 accumulation.
    qk = jnp.dot(x_bf, wqk_ref[...], preferred_element_type=f32)   # (R, 2H)
    mq = qk[:, :H] + bq                            # mixed_query_layer, f32
    mk = qk[:, H:] + bk                            # mixed_key_layer,   f32
    mq_bf = mq.astype(bf16)

    # Query-attention scores for every row in the block at once.
    q_score = (jnp.dot(mq_bf, wqa_ref[...], preferred_element_type=f32)
               + bqa) * scale + mask               # (R, nh) f32

    def seq_softmax(scores):                       # softmax over the seq axis
        m = jnp.max(scores, axis=0, keepdims=True)
        e = jnp.exp(scores - m)
        return e * pl.reciprocal(jnp.sum(e, axis=0, keepdims=True), approx=True)

    def head_pool(weights, values_bf):             # (S,nh) f32, (S,H) bf16 -> (1,H)
        # Seq contraction runs on the MXU; only a tiny (nh,H) multiply + nh-row
        # reduction is left on the VPU/XLU.
        w_t = weights.T.astype(bf16)               # (nh, S)
        per_head = jnp.dot(w_t, values_bf, preferred_element_type=f32)  # (nh, H)
        return jnp.sum(per_head * expand, axis=0, keepdims=True)

    # Per-sequence softmax pooling; block_b is a small static int -> unrolled.
    for b in range(block_b):
        rows = slice(b * S, (b + 1) * S)
        mq_b, mq_b_bf, mk_b = mq[rows], mq_bf[rows], mk[rows]

        qw = seq_softmax(q_score[rows])            # (S, nh)
        pooled_q = head_pool(qw, mq_b_bf)          # (1, H)

        mqk = mk_b * pooled_q                      # mixed_query_key_layer
        mqk_bf = mqk.astype(bf16)
        k_score = (jnp.dot(mqk_bf, wka_ref[...], preferred_element_type=f32)
                   + bka) * scale + mask[rows]
        kw = seq_softmax(k_score)
        pooled_k = head_pool(kw, mqk_bf)           # (1, H)

        wv_scratch[rows, :] = pooled_k * mq_b      # weighted_value, (S, H) f32

    wv = wv_scratch[...]                           # (R, H) f32

    # transform + residual with mixed_query_layer
    wv = jnp.dot(wv.astype(bf16), wt_ref[...], preferred_element_type=f32) + bt + mq

    # BertSelfOutput: dense -> (dropout = identity in eval) -> residual -> LayerNorm
    y = jnp.dot(wv.astype(bf16), wo_ref[...], preferred_element_type=f32) + bo
    y = y + x_bf.astype(f32)
    mean = jnp.mean(y, axis=-1, keepdims=True)
    var = jnp.mean((y - mean) ** 2, axis=-1, keepdims=True)
    y = (y - mean) * jax.lax.rsqrt(var + eps)
    o_ref[...] = y * gamma + beta


def _const_spec(shape, single_buffer):
    """BlockSpec for grid-constant parameters (block index never changes)."""
    index_map = lambda *_: (0,) * len(shape)
    if single_buffer:
        # Double-buffering a constant block is pure VMEM waste.
        return pl.BlockSpec(shape, index_map, pipeline_mode=pl.Buffered(1))
    return pl.BlockSpec(shape, index_map)


def _pick_block_b(batch, seq_len):
    """Pack several short sequences per grid step so the big matmuls see an
    MXU M-dimension of block_b*seq_len (must divide batch; bounded unroll)."""
    best = 1
    for cand in range(2, batch + 1):
        if batch % cand == 0 and cand * seq_len <= 256 and cand <= 8:
            best = cand
    return best


def fast_attention(x, mask, params, *, num_heads, eps=1e-12, block_b=None):
    """FastAttention forward.

    x:    (B, S, H) hidden states (f32).
    mask: (B, S) additive attention mask (0 keep, -10000 masked) == the
          PyTorch extended_attention_mask per position, broadcast over heads.
    params: tuple from make_params (f32, weights stored as (in, out)).
    """
    (wq, bq, wqa, bqa, wk, bk, wka, bka,
     wt, bt, wo, bo, gamma, beta) = params
    B, S, H = x.shape
    nh = num_heads
    d = H // nh
    if block_b is None:
        block_b = _pick_block_b(B, S)
    assert B % block_b == 0
    R = block_b * S

    bf16 = jnp.bfloat16
    # Kernel-side parameter packing (in production, pre-pack once).
    wqk = jnp.concatenate([wq, wk], axis=1).astype(bf16)         # (H, 2H)
    wqa_b, wka_b = wqa.astype(bf16), wka.astype(bf16)            # (H, nh)
    wt_b, wo_b = wt.astype(bf16), wo.astype(bf16)                # (H, H)

    def pad_nh(v):                                               # (1, nh) -> (1, H)
        return jnp.pad(v, ((0, 0), (0, H - nh)))
    biases = jnp.concatenate(
        [bq, bk, pad_nh(bqa), pad_nh(bka), bt, bo, gamma, beta],
        axis=0).astype(jnp.float32)                              # (8, H)

    # Head-expansion mask, hoisted out of the kernel: expand[h, h*d + j] = 1.
    r = jax.lax.broadcasted_iota(jnp.int32, (nh, H), 0)
    c = jax.lax.broadcasted_iota(jnp.int32, (nh, H), 1)
    expand = (c // d == r).astype(jnp.float32)

    # Flatten (B, S) rows so each grid step works on a lane-dense 2-D slab.
    x2 = x.reshape(B * S, H).astype(bf16)
    mask2 = jnp.broadcast_to(
        mask.astype(jnp.float32).reshape(B, S, 1), (B, S, nh)).reshape(B * S, nh)

    kernel = functools.partial(
        fast_attention_kernel,
        num_heads=nh, head_dim=d, seq_len=S, block_b=block_b, eps=eps)

    def build(single_buffer_weights):
        cs = lambda shape: _const_spec(shape, single_buffer_weights)
        return pl.pallas_call(
            kernel,
            out_shape=jax.ShapeDtypeStruct((B * S, H), jnp.float32),
            grid=(B // block_b,),
            in_specs=[
                pl.BlockSpec((R, H), lambda i: (i, 0)),    # hidden states
                pl.BlockSpec((R, nh), lambda i: (i, 0)),   # additive mask
                cs((nh, H)),                               # head-expansion mask
                cs((H, 2 * H)),                            # fused Wq | Wk
                cs((H, nh)), cs((H, nh)),                  # query_att / key_att
                cs((H, H)), cs((H, H)),                    # transform / out dense
                cs((8, H)),                                # packed biases + LN
            ],
            out_specs=pl.BlockSpec((R, H), lambda i: (i, 0)),
            scratch_shapes=[pltpu.VMEM((R, H), jnp.float32)],
            compiler_params=pltpu.CompilerParams(
                dimension_semantics=("parallel",),
                vmem_limit_bytes=48 * 1024 * 1024),
        )

    args = (x2, mask2, expand, wqk, wqa_b, wka_b, wt_b, wo_b, biases)
    try:
        out = build(True)(*args)
    except Exception:
        # pl.Buffered(1) (single-buffered resident weights) not supported by
        # this jax/Mosaic build -- fall back to default double buffering.
        out = build(False)(*args)
    return out.reshape(B, S, H)


def make_params(key, hidden_size, num_heads, initializer_range=0.02):
    """Synthetic init matching the PyTorch module's init_weights.

    Linear weights ~ N(0, initializer_range), biases = 0, LayerNorm gamma=1
    beta=0.  Weights are stored pre-transposed as (in_features, out_features).
    """
    H, nh = hidden_size, num_heads
    ks = jax.random.split(key, 6)
    std = initializer_range
    wq = std * jax.random.normal(ks[0], (H, H), jnp.float32)
    wqa = std * jax.random.normal(ks[1], (H, nh), jnp.float32)
    wk = std * jax.random.normal(ks[2], (H, H), jnp.float32)
    wka = std * jax.random.normal(ks[3], (H, nh), jnp.float32)
    wt = std * jax.random.normal(ks[4], (H, H), jnp.float32)
    wo = std * jax.random.normal(ks[5], (H, H), jnp.float32)
    bq = jnp.zeros((1, H), jnp.float32)
    bqa = jnp.zeros((1, nh), jnp.float32)
    bk = jnp.zeros((1, H), jnp.float32)
    bka = jnp.zeros((1, nh), jnp.float32)
    bt = jnp.zeros((1, H), jnp.float32)
    bo = jnp.zeros((1, H), jnp.float32)
    gamma = jnp.ones((1, H), jnp.float32)
    beta = jnp.zeros((1, H), jnp.float32)
    return (wq, bq, wqa, bqa, wk, bk, wka, bka, wt, bt, wo, bo, gamma, beta)


def reference(x, mask, params, num_heads, eps=1e-12):
    """Pure-JAX f32 transcription of the PyTorch forward (verification)."""
    (wq, bq, wqa, bqa, wk, bk, wka, bka,
     wt, bt, wo, bo, gamma, beta) = params
    B, S, H = x.shape
    nh = num_heads
    d = H // nh
    m = mask[:, None, :]                                     # (B, 1, S)
    mq = x @ wq + bq
    mk = x @ wk + bk
    qfs = jnp.transpose(mq @ wqa + bqa, (0, 2, 1)) / (d ** 0.5) + m
    qw = jax.nn.softmax(qfs, axis=-1)[:, :, None, :]         # (B, nh, 1, S)
    ql = jnp.transpose(mq.reshape(B, S, nh, d), (0, 2, 1, 3))
    pq = jnp.transpose(jnp.matmul(qw, ql), (0, 2, 1, 3)).reshape(B, 1, H)
    mqk = mk * pq
    kfs = jnp.transpose(mqk @ wka + bka, (0, 2, 1)) / (d ** 0.5) + m
    kw = jax.nn.softmax(kfs, axis=-1)[:, :, None, :]
    kl = jnp.transpose(mqk.reshape(B, S, nh, d), (0, 2, 1, 3))
    pk = jnp.matmul(kw, kl)                                  # (B, nh, 1, d)
    wv = jnp.transpose(pk * ql, (0, 2, 1, 3)).reshape(B, S, H)
    wv = wv @ wt + bt + mq
    y = wv @ wo + bo + x
    mean = y.mean(-1, keepdims=True)
    var = ((y - mean) ** 2).mean(-1, keepdims=True)
    return (y - mean) / jnp.sqrt(var + eps) * gamma + beta


if __name__ == "__main__":
    B, S, H, NH = 2, 8, 32, 4     # batch, seq, hidden_size, num_attention_heads

    key = jax.random.PRNGKey(0)
    kx, kp = jax.random.split(key)
    x = jax.random.normal(kx, (B, S, H), jnp.float32)

    # Additive attention mask (0 = keep, -10000 = mask out), per position.
    mask = jnp.zeros((B, S), jnp.float32)
    mask = mask.at[1, S - 2:].set(-10000.0)

    params = make_params(kp, H, NH, initializer_range=0.02)

    out = fast_attention(x, mask, params, num_heads=NH)
    out = jax.block_until_ready(out)

    ref = reference(x, mask, params, NH)
    max_err = float(jnp.max(jnp.abs(out - ref)))
    assert out.shape == (B, S, H), out.shape
    assert max_err < 2e-2, f"max abs error too large: {max_err}"

    print("KERNEL_OK")
</pallas_src>

<mosaic_0001>
module attributes {stable_mosaic.version = 11 : i64} {
  func.func @fast_attention_kernel(%arg0: i32, %arg1: memref<16x32xbf16, #tpu.memory_space<vmem>>, %arg2: memref<16x4xf32, #tpu.memory_space<vmem>>, %arg3: memref<4x32xf32, #tpu.memory_space<vmem>>, %arg4: memref<32x64xbf16, #tpu.memory_space<vmem>>, %arg5: memref<32x4xbf16, #tpu.memory_space<vmem>>, %arg6: memref<32x4xbf16, #tpu.memory_space<vmem>>, %arg7: memref<32x32xbf16, #tpu.memory_space<vmem>>, %arg8: memref<32x32xbf16, #tpu.memory_space<vmem>>, %arg9: memref<8x32xf32, #tpu.memory_space<vmem>>, %arg10: memref<16x32xf32, #tpu.memory_space<vmem>>, %arg11: memref<16x32xf32, #tpu.memory_space<vmem>>) attributes {dimension_semantics = [#tpu.dimension_semantics<parallel>], iteration_bounds = array<i64: 1>, scalar_prefetch = 0 : i64, scratch_operands = 1 : i64, tpu.core_type = #tpu.core_type<tc>, window_params = [{transform_indices = @transform_0, window_bounds = array<i64: 16, 32>}, {transform_indices = @transform_1, window_bounds = array<i64: 16, 4>}, {pipeline_mode = #tpu.pipeline_mode<synchronous>, transform_indices = @transform_2, window_bounds = array<i64: 4, 32>}, {pipeline_mode = #tpu.pipeline_mode<synchronous>, transform_indices = @transform_3, window_bounds = array<i64: 32, 64>}, {pipeline_mode = #tpu.pipeline_mode<synchronous>, transform_indices = @transform_4, window_bounds = array<i64: 32, 4>}, {pipeline_mode = #tpu.pipeline_mode<synchronous>, transform_indices = @transform_5, window_bounds = array<i64: 32, 4>}, {pipeline_mode = #tpu.pipeline_mode<synchronous>, transform_indices = @transform_6, window_bounds = array<i64: 32, 32>}, {pipeline_mode = #tpu.pipeline_mode<synchronous>, transform_indices = @transform_7, window_bounds = array<i64: 32, 32>}, {pipeline_mode = #tpu.pipeline_mode<synchronous>, transform_indices = @transform_8, window_bounds = array<i64: 8, 32>}, {transform_indices = @transform_9, window_bounds = array<i64: 16, 32>}]} {
    %c0 = arith.constant 0 : index
    %c0_0 = arith.constant 0 : index
    %0 = vector.load %arg3[%c0, %c0_0] : memref<4x32xf32, #tpu.memory_space<vmem>>, vector<4x32xf32>
    %c0_1 = arith.constant 0 : index
    %c0_2 = arith.constant 0 : index
    %1 = vector.load %arg9[%c0_1, %c0_2] : memref<8x32xf32, #tpu.memory_space<vmem>>, vector<8x32xf32>
    %2 = vector.extract_strided_slice %1 {offsets = [0, 0], sizes = [1, 32], strides = [1, 1]} : vector<8x32xf32> to vector<1x32xf32>
    %3 = vector.extract_strided_slice %1 {offsets = [1, 0], sizes = [1, 32], strides = [1, 1]} : vector<8x32xf32> to vector<1x32xf32>
    %4 = vector.extract_strided_slice %1 {offsets = [2, 0], sizes = [1, 4], strides = [1, 1]} : vector<8x32xf32> to vector<1x4xf32>
    %5 = vector.extract_strided_slice %1 {offsets = [3, 0], sizes = [1, 4], strides = [1, 1]} : vector<8x32xf32> to vector<1x4xf32>
    %6 = vector.extract_strided_slice %1 {offsets = [4, 0], sizes = [1, 32], strides = [1, 1]} : vector<8x32xf32> to vector<1x32xf32>
    %7 = vector.extract_strided_slice %1 {offsets = [5, 0], sizes = [1, 32], strides = [1, 1]} : vector<8x32xf32> to vector<1x32xf32>
    %8 = vector.extract_strided_slice %1 {offsets = [6, 0], sizes = [1, 32], strides = [1, 1]} : vector<8x32xf32> to vector<1x32xf32>
    %9 = vector.extract_strided_slice %1 {offsets = [7, 0], sizes = [1, 32], strides = [1, 1]} : vector<8x32xf32> to vector<1x32xf32>
    %c0_3 = arith.constant 0 : index
    %c0_4 = arith.constant 0 : index
    %10 = vector.load %arg1[%c0_3, %c0_4] : memref<16x32xbf16, #tpu.memory_space<vmem>>, vector<16x32xbf16>
    %c0_5 = arith.constant 0 : index
    %c0_6 = arith.constant 0 : index
    %11 = vector.load %arg2[%c0_5, %c0_6] : memref<16x4xf32, #tpu.memory_space<vmem>>, vector<16x4xf32>
    %c0_7 = arith.constant 0 : index
    %c0_8 = arith.constant 0 : index
    %12 = vector.load %arg4[%c0_7, %c0_8] : memref<32x64xbf16, #tpu.memory_space<vmem>>, vector<32x64xbf16>
    %cst = arith.constant dense<0.000000e+00> : vector<16x64xf32>
    %13 = tpu.matmul %10, %12, %cst {dimension_numbers = #tpu.dot_dimension_numbers<[1], [0], [0], [1], [0, 0, 1, 1], [], []>} : vector<16x32xbf16>, vector<32x64xbf16>, vector<16x64xf32> -> vector<16x64xf32>
    %14 = vector.extract_strided_slice %13 {offsets = [0, 0], sizes = [16, 32], strides = [1, 1]} : vector<16x64xf32> to vector<16x32xf32>
    %15 = vector.broadcast %2 : vector<1x32xf32> to vector<16x32xf32>
    %16 = arith.addf %14, %15 : vector<16x32xf32>
    %17 = vector.extract_strided_slice %13 {offsets = [0, 32], sizes = [16, 32], strides = [1, 1]} : vector<16x64xf32> to vector<16x32xf32>
    %18 = vector.broadcast %3 : vector<1x32xf32> to vector<16x32xf32>
    %19 = arith.addf %17, %18 : vector<16x32xf32>
    %20 = arith.truncf %16 : vector<16x32xf32> to vector<16x32xbf16>
    %c0_9 = arith.constant 0 : index
    %c0_10 = arith.constant 0 : index
    %21 = vector.load %arg5[%c0_9, %c0_10] : memref<32x4xbf16, #tpu.memory_space<vmem>>, vector<32x4xbf16>
    %cst_11 = arith.constant dense<0.000000e+00> : vector<16x4xf32>
    %22 = tpu.matmul %20, %21, %cst_11 {dimension_numbers = #tpu.dot_dimension_numbers<[1], [0], [0], [1], [0, 0, 1, 1], [], []>} : vector<16x32xbf16>, vector<32x4xbf16>, vector<16x4xf32> -> vector<16x4xf32>
    %23 = vector.broadcast %4 : vector<1x4xf32> to vector<16x4xf32>
    %24 = arith.addf %22, %23 : vector<16x4xf32>
    %cst_12 = arith.constant 0.353553385 : f32
    %25 = vector.broadcast %cst_12 : f32 to vector<16x4xf32>
    %26 = arith.mulf %24, %25 : vector<16x4xf32>
    %27 = arith.addf %26, %11 : vector<16x4xf32>
    %28 = vector.extract_strided_slice %16 {offsets = [0, 0], sizes = [8, 32], strides = [1, 1]} : vector<16x32xf32> to vector<8x32xf32>
    %29 = vector.extract_strided_slice %20 {offsets = [0, 0], sizes = [8, 32], strides = [1, 1]} : vector<16x32xbf16> to vector<8x32xbf16>
    %30 = vector.extract_strided_slice %19 {offsets = [0, 0], sizes = [8, 32], strides = [1, 1]} : vector<16x32xf32> to vector<8x32xf32>
    %31 = vector.extract_strided_slice %27 {offsets = [0, 0], sizes = [8, 4], strides = [1, 1]} : vector<16x4xf32> to vector<8x4xf32>
    %cst_13 = arith.constant dense<0xFF800000> : vector<4xf32>
    %32 = vector.multi_reduction <maximumf>, %31, %cst_13 [0] : vector<8x4xf32> to vector<4xf32>
    %33 = vector.shape_cast %32 : vector<4xf32> to vector<1x4xf32>
    %34 = vector.broadcast %33 : vector<1x4xf32> to vector<8x4xf32>
    %35 = arith.subf %31, %34 : vector<8x4xf32>
    %36 = math.exp %35 : vector<8x4xf32>
    %cst_14 = arith.constant dense<0.000000e+00> : vector<4xf32>
    %37 = vector.multi_reduction <add>, %36, %cst_14 [0] : vector<8x4xf32> to vector<4xf32>
    %38 = vector.shape_cast %37 : vector<4xf32> to vector<1x4xf32>
    %39 = tpu.reciprocal %38 {approx = true} : vector<1x4xf32> -> vector<1x4xf32>
    %40 = vector.broadcast %39 : vector<1x4xf32> to vector<8x4xf32>
    %41 = arith.mulf %36, %40 : vector<8x4xf32>
    %42 = tpu.transpose %41, [1, 0] : vector<8x4xf32> -> vector<4x8xf32>
    %43 = arith.truncf %42 : vector<4x8xf32> to vector<4x8xbf16>
    %cst_15 = arith.constant dense<0.000000e+00> : vector<4x32xf32>
    %44 = tpu.matmul %43, %29, %cst_15 {dimension_numbers = #tpu.dot_dimension_numbers<[1], [0], [0], [1], [0, 0, 1, 1], [], []>} : vector<4x8xbf16>, vector<8x32xbf16>, vector<4x32xf32> -> vector<4x32xf32>
    %45 = arith.mulf %44, %0 : vector<4x32xf32>
    %cst_16 = arith.constant dense<0.000000e+00> : vector<32xf32>
    %46 = vector.multi_reduction <add>, %45, %cst_16 [0] : vector<4x32xf32> to vector<32xf32>
    %47 = vector.shape_cast %46 : vector<32xf32> to vector<1x32xf32>
    %48 = vector.broadcast %47 : vector<1x32xf32> to vector<8x32xf32>
    %49 = arith.mulf %30, %48 : vector<8x32xf32>
    %50 = arith.truncf %49 : vector<8x32xf32> to vector<8x32xbf16>
    %c0_17 = arith.constant 0 : index
    %c0_18 = arith.constant 0 : index
    %51 = vector.load %arg6[%c0_17, %c0_18] : memref<32x4xbf16, #tpu.memory_space<vmem>>, vector<32x4xbf16>
    %cst_19 = arith.constant dense<0.000000e+00> : vector<8x4xf32>
    %52 = tpu.matmul %50, %51, %cst_19 {dimension_numbers = #tpu.dot_dimension_numbers<[1], [0], [0], [1], [0, 0, 1, 1], [], []>} : vector<8x32xbf16>, vector<32x4xbf16>, vector<8x4xf32> -> vector<8x4xf32>
    %53 = vector.broadcast %5 : vector<1x4xf32> to vector<8x4xf32>
    %54 = arith.addf %52, %53 : vector<8x4xf32>
    %cst_20 = arith.constant 0.353553385 : f32
    %55 = vector.broadcast %cst_20 : f32 to vector<8x4xf32>
    %56 = arith.mulf %54, %55 : vector<8x4xf32>
    %57 = vector.extract_strided_slice %11 {offsets = [0, 0], sizes = [8, 4], strides = [1, 1]} : vector<16x4xf32> to vector<8x4xf32>
    %58 = arith.addf %56, %57 : vector<8x4xf32>
    %cst_21 = arith.constant dense<0xFF800000> : vector<4xf32>
    %59 = vector.multi_reduction <maximumf>, %58, %cst_21 [0] : vector<8x4xf32> to vector<4xf32>
    %60 = vector.shape_cast %59 : vector<4xf32> to vector<1x4xf32>
    %61 = vector.broadcast %60 : vector<1x4xf32> to vector<8x4xf32>
    %62 = arith.subf %58, %61 : vector<8x4xf32>
    %63 = math.exp %62 : vector<8x4xf32>
    %cst_22 = arith.constant dense<0.000000e+00> : vector<4xf32>
    %64 = vector.multi_reduction <add>, %63, %cst_22 [0] : vector<8x4xf32> to vector<4xf32>
    %65 = vector.shape_cast %64 : vector<4xf32> to vector<1x4xf32>
    %66 = tpu.reciprocal %65 {approx = true} : vector<1x4xf32> -> vector<1x4xf32>
    %67 = vector.broadcast %66 : vector<1x4xf32> to vector<8x4xf32>
    %68 = arith.mulf %63, %67 : vector<8x4xf32>
    %69 = tpu.transpose %68, [1, 0] : vector<8x4xf32> -> vector<4x8xf32>
    %70 = arith.truncf %69 : vector<4x8xf32> to vector<4x8xbf16>
    %cst_23 = arith.constant dense<0.000000e+00> : vector<4x32xf32>
    %71 = tpu.matmul %70, %50, %cst_23 {dimension_numbers = #tpu.dot_dimension_numbers<[1], [0], [0], [1], [0, 0, 1, 1], [], []>} : vector<4x8xbf16>, vector<8x32xbf16>, vector<4x32xf32> -> vector<4x32xf32>
    %72 = arith.mulf %71, %0 : vector<4x32xf32>
    %cst_24 = arith.constant dense<0.000000e+00> : vector<32xf32>
    %73 = vector.multi_reduction <add>, %72, %cst_24 [0] : vector<4x32xf32> to vector<32xf32>
    %74 = vector.shape_cast %73 : vector<32xf32> to vector<1x32xf32>
    %75 = vector.broadcast %74 : vector<1x32xf32> to vector<8x32xf32>
    %76 = arith.mulf %75, %28 : vector<8x32xf32>
    %c0_25 = arith.constant 0 : index
    %c0_26 = arith.constant 0 : index
    %77 = vector.load %arg11[%c0_25, %c0_26] : memref<16x32xf32, #tpu.memory_space<vmem>>, vector<8x32xf32>
    tpu.vector_store %arg11[%c0_25, %c0_26], %76 {strides = array<i32>} : memref<16x32xf32, #tpu.memory_space<vmem>>, vector<8x32xf32>,
    %78 = vector.extract_strided_slice %16 {offsets = [8, 0], sizes = [8, 32], strides = [1, 1]} : vector<16x32xf32> to vector<8x32xf32>
    %79 = vector.extract_strided_slice %20 {offsets = [8, 0], sizes = [8, 32], strides = [1, 1]} : vector<16x32xbf16> to vector<8x32xbf16>
    %80 = vector.extract_strided_slice %19 {offsets = [8, 0], sizes = [8, 32], strides = [1, 1]} : vector<16x32xf32> to vector<8x32xf32>
    %81 = vector.extract_strided_slice %27 {offsets = [8, 0], sizes = [8, 4], strides = [1, 1]} : vector<16x4xf32> to vector<8x4xf32>
    %cst_27 = arith.constant dense<0xFF800000> : vector<4xf32>
    %82 = vector.multi_reduction <maximumf>, %81, %cst_27 [0] : vector<8x4xf32> to vector<4xf32>
    %83 = vector.shape_cast %82 : vector<4xf32> to vector<1x4xf32>
    %84 = vector.broadcast %83 : vector<1x4xf32> to vector<8x4xf32>
    %85 = arith.subf %81, %84 : vector<8x4xf32>
    %86 = math.exp %85 : vector<8x4xf32>
    %cst_28 = arith.constant dense<0.000000e+00> : vector<4xf32>
    %87 = vector.multi_reduction <add>, %86, %cst_28 [0] : vector<8x4xf32> to vector<4xf32>
    %88 = vector.shape_cast %87 : vector<4xf32> to vector<1x4xf32>
    %89 = tpu.reciprocal %88 {approx = true} : vector<1x4xf32> -> vector<1x4xf32>
    %90 = vector.broadcast %89 : vector<1x4xf32> to vector<8x4xf32>
    %91 = arith.mulf %86, %90 : vector<8x4xf32>
    %92 = tpu.transpose %91, [1, 0] : vector<8x4xf32> -> vector<4x8xf32>
    %93 = arith.truncf %92 : vector<4x8xf32> to vector<4x8xbf16>
    %cst_29 = arith.constant dense<0.000000e+00> : vector<4x32xf32>
    %94 = tpu.matmul %93, %79, %cst_29 {dimension_numbers = #tpu.dot_dimension_numbers<[1], [0], [0], [1], [0, 0, 1, 1], [], []>} : vector<4x8xbf16>, vector<8x32xbf16>, vector<4x32xf32> -> vector<4x32xf32>
    %95 = arith.mulf %94, %0 : vector<4x32xf32>
    %cst_30 = arith.constant dense<0.000000e+00> : vector<32xf32>
    %96 = vector.multi_reduction <add>, %95, %cst_30 [0] : vector<4x32xf32> to vector<32xf32>
    %97 = vector.shape_cast %96 : vector<32xf32> to vector<1x32xf32>
    %98 = vector.broadcast %97 : vector<1x32xf32> to vector<8x32xf32>
    %99 = arith.mulf %80, %98 : vector<8x32xf32>
    %100 = arith.truncf %99 : vector<8x32xf32> to vector<8x32xbf16>
    %c0_31 = arith.constant 0 : index
    %c0_32 = arith.constant 0 : index
    %101 = vector.load %arg6[%c0_31, %c0_32] : memref<32x4xbf16, #tpu.memory_space<vmem>>, vector<32x4xbf16>
    %cst_33 = arith.constant dense<0.000000e+00> : vector<8x4xf32>
    %102 = tpu.matmul %100, %101, %cst_33 {dimension_numbers = #tpu.dot_dimension_numbers<[1], [0], [0], [1], [0, 0, 1, 1], [], []>} : vector<8x32xbf16>, vector<32x4xbf16>, vector<8x4xf32> -> vector<8x4xf32>
    %103 = vector.broadcast %5 : vector<1x4xf32> to vector<8x4xf32>
    %104 = arith.addf %102, %103 : vector<8x4xf32>
    %cst_34 = arith.constant 0.353553385 : f32
    %105 = vector.broadcast %cst_34 : f32 to vector<8x4xf32>
    %106 = arith.mulf %104, %105 : vector<8x4xf32>
    %107 = vector.extract_strided_slice %11 {offsets = [8, 0], sizes = [8, 4], strides = [1, 1]} : vector<16x4xf32> to vector<8x4xf32>
    %108 = arith.addf %106, %107 : vector<8x4xf32>
    %cst_35 = arith.constant dense<0xFF800000> : vector<4xf32>
    %109 = vector.multi_reduction <maximumf>, %108, %cst_35 [0] : vector<8x4xf32> to vector<4xf32>
    %110 = vector.shape_cast %109 : vector<4xf32> to vector<1x4xf32>
    %111 = vector.broadcast %110 : vector<1x4xf32> to vector<8x4xf32>
    %112 = arith.subf %108, %111 : vector<8x4xf32>
    %113 = math.exp %112 : vector<8x4xf32>
    %cst_36 = arith.constant dense<0.000000e+00> : vector<4xf32>
    %114 = vector.multi_reduction <add>, %113, %cst_36 [0] : vector<8x4xf32> to vector<4xf32>
    %115 = vector.shape_cast %114 : vector<4xf32> to vector<1x4xf32>
    %116 = tpu.reciprocal %115 {approx = true} : vector<1x4xf32> -> vector<1x4xf32>
    %117 = vector.broadcast %116 : vector<1x4xf32> to vector<8x4xf32>
    %118 = arith.mulf %113, %117 : vector<8x4xf32>
    %119 = tpu.transpose %118, [1, 0] : vector<8x4xf32> -> vector<4x8xf32>
    %120 = arith.truncf %119 : vector<4x8xf32> to vector<4x8xbf16>
    %cst_37 = arith.constant dense<0.000000e+00> : vector<4x32xf32>
    %121 = tpu.matmul %120, %100, %cst_37 {dimension_numbers = #tpu.dot_dimension_numbers<[1], [0], [0], [1], [0, 0, 1, 1], [], []>} : vector<4x8xbf16>, vector<8x32xbf16>, vector<4x32xf32> -> vector<4x32xf32>
    %122 = arith.mulf %121, %0 : vector<4x32xf32>
    %cst_38 = arith.constant dense<0.000000e+00> : vector<32xf32>
    %123 = vector.multi_reduction <add>, %122, %cst_38 [0] : vector<4x32xf32> to vector<32xf32>
    %124 = vector.shape_cast %123 : vector<32xf32> to vector<1x32xf32>
    %125 = vector.broadcast %124 : vector<1x32xf32> to vector<8x32xf32>
    %126 = arith.mulf %125, %78 : vector<8x32xf32>
    %c8 = arith.constant 8 : index
    %c0_39 = arith.constant 0 : index
    %127 = vector.load %arg11[%c8, %c0_39] : memref<16x32xf32, #tpu.memory_space<vmem>>, vector<8x32xf32>
    tpu.vector_store %arg11[%c8, %c0_39], %126 {strides = array<i32>} : memref<16x32xf32, #tpu.memory_space<vmem>>, vector<8x32xf32>,
    %c0_40 = arith.constant 0 : index
    %c0_41 = arith.constant 0 : index
    %128 = vector.load %arg11[%c0_40, %c0_41] : memref<16x32xf32, #tpu.memory_space<vmem>>, vector<16x32xf32>
    %129 = arith.truncf %128 : vector<16x32xf32> to vector<16x32xbf16>
    %c0_42 = arith.constant 0 : index
    %c0_43 = arith.constant 0 : index
    %130 = vector.load %arg7[%c0_42, %c0_43] : memref<32x32xbf16, #tpu.memory_space<vmem>>, vector<32x32xbf16>
    %cst_44 = arith.constant dense<0.000000e+00> : vector<16x32xf32>
    %131 = tpu.matmul %129, %130, %cst_44 {dimension_numbers = #tpu.dot_dimension_numbers<[1], [0], [0], [1], [0, 0, 1, 1], [], []>} : vector<16x32xbf16>, vector<32x32xbf16>, vector<16x32xf32> -> vector<16x32xf32>
    %132 = vector.broadcast %6 : vector<1x32xf32> to vector<16x32xf32>
    %133 = arith.addf %131, %132 : vector<16x32xf32>
    %134 = arith.addf %133, %16 : vector<16x32xf32>
    %135 = arith.truncf %134 : vector<16x32xf32> to vector<16x32xbf16>
    %c0_45 = arith.constant 0 : index
    %c0_46 = arith.constant 0 : index
    %136 = vector.load %arg8[%c0_45, %c0_46] : memref<32x32xbf16, #tpu.memory_space<vmem>>, vector<32x32xbf16>
    %cst_47 = arith.constant dense<0.000000e+00> : vector<16x32xf32>
    %137 = tpu.matmul %135, %136, %cst_47 {dimension_numbers = #tpu.dot_dimension_numbers<[1], [0], [0], [1], [0, 0, 1, 1], [], []>} : vector<16x32xbf16>, vector<32x32xbf16>, vector<16x32xf32> -> vector<16x32xf32>
    %138 = vector.broadcast %7 : vector<1x32xf32> to vector<16x32xf32>
    %139 = arith.addf %137, %138 : vector<16x32xf32>
    %140 = arith.extf %10 : vector<16x32xbf16> to vector<16x32xf32>
    %141 = arith.addf %139, %140 : vector<16x32xf32>
    %cst_48 = arith.constant dense<0.000000e+00> : vector<16xf32>
    %142 = vector.multi_reduction <add>, %141, %cst_48 [1] : vector<16x32xf32> to vector<16xf32>
    %143 = vector.shape_cast %142 : vector<16xf32> to vector<16x1xf32>
    %cst_49 = arith.constant 3.200000e+01 : f32
    %144 = vector.broadcast %cst_49 : f32 to vector<16x1xf32>
    %145 = arith.divf %143, %144 : vector<16x1xf32>
    %146 = vector.broadcast %145 : vector<16x1xf32> to vector<16x32xf32>
    %147 = arith.subf %141, %146 : vector<16x32xf32>
    %148 = arith.mulf %147, %147 : vector<16x32xf32>
    %cst_50 = arith.constant dense<0.000000e+00> : vector<16xf32>
    %149 = vector.multi_reduction <add>, %148, %cst_50 [1] : vector<16x32xf32> to vector<16xf32>
    %150 = vector.shape_cast %149 : vector<16xf32> to vector<16x1xf32>
    %cst_51 = arith.constant 3.200000e+01 : f32
    %151 = vector.broadcast %cst_51 : f32 to vector<16x1xf32>
    %152 = arith.divf %150, %151 : vector<16x1xf32>
    %153 = vector.broadcast %145 : vector<16x1xf32> to vector<16x32xf32>
    %154 = arith.subf %141, %153 : vector<16x32xf32>
    %cst_52 = arith.constant 9.99999996E-13 : f32
    %155 = vector.broadcast %cst_52 : f32 to vector<16x1xf32>
    %156 = arith.addf %152, %155 : vector<16x1xf32>
    %157 = math.rsqrt %156 : vector<16x1xf32>
    %158 = vector.broadcast %157 : vector<16x1xf32> to vector<16x32xf32>
    %159 = arith.mulf %154, %158 : vector<16x32xf32>
    %160 = vector.broadcast %8 : vector<1x32xf32> to vector<16x32xf32>
    %161 = arith.mulf %159, %160 : vector<16x32xf32>
    %162 = vector.broadcast %9 : vector<1x32xf32> to vector<16x32xf32>
    %163 = arith.addf %161, %162 : vector<16x32xf32>
    %c0_53 = arith.constant 0 : index
    %c0_54 = arith.constant 0 : index
    %164 = vector.load %arg10[%c0_53, %c0_54] : memref<16x32xf32, #tpu.memory_space<vmem>>, vector<16x32xf32>
    tpu.vector_store %arg10[%c0_53, %c0_54], %163 {strides = array<i32>} : memref<16x32xf32, #tpu.memory_space<vmem>>, vector<16x32xf32>,
    return
  }
  func.func @transform_0(%arg0: i32) -> (i32, i32) {
    %c0_i32 = arith.constant 0 : i32
    %c0_i32_0 = arith.constant 0 : i32
    return %arg0, %c0_i32 : i32, i32
  }
  func.func @transform_1(%arg0: i32) -> (i32, i32) {
    %c0_i32 = arith.constant 0 : i32
    %c0_i32_0 = arith.constant 0 : i32
    return %arg0, %c0_i32 : i32, i32
  }
  func.func @transform_2(%arg0: i32) -> (i32, i32) {
    %c0_i32 = arith.constant 0 : i32
    %c0_i32_0 = arith.constant 0 : i32
    %c0_i32_1 = arith.constant 0 : i32
    return %c0_i32, %c0_i32_0 : i32, i32
  }
  func.func @transform_3(%arg0: i32) -> (i32, i32) {
    %c0_i32 = arith.constant 0 : i32
    %c0_i32_0 = arith.constant 0 : i32
    %c0_i32_1 = arith.constant 0 : i32
    return %c0_i32, %c0_i32_0 : i32, i32
  }
  func.func @transform_4(%arg0: i32) -> (i32, i32) {
    %c0_i32 = arith.constant 0 : i32
    %c0_i32_0 = arith.constant 0 : i32
    %c0_i32_1 = arith.constant 0 : i32
    return %c0_i32, %c0_i32_0 : i32, i32
  }
  func.func @transform_5(%arg0: i32) -> (i32, i32) {
    %c0_i32 = arith.constant 0 : i32
    %c0_i32_0 = arith.constant 0 : i32
    %c0_i32_1 = arith.constant 0 : i32
    return %c0_i32, %c0_i32_0 : i32, i32
  }
  func.func @transform_6(%arg0: i32) -> (i32, i32) {
    %c0_i32 = arith.constant 0 : i32
    %c0_i32_0 = arith.constant 0 : i32
    %c0_i32_1 = arith.constant 0 : i32
    return %c0_i32, %c0_i32_0 : i32, i32
  }
  func.func @transform_7(%arg0: i32) -> (i32, i32) {
    %c0_i32 = arith.constant 0 : i32
    %c0_i32_0 = arith.constant 0 : i32
    %c0_i32_1 = arith.constant 0 : i32
    return %c0_i32, %c0_i32_0 : i32, i32
  }
  func.func @transform_8(%arg0: i32) -> (i32, i32) {
    %c0_i32 = arith.constant 0 : i32
    %c0_i32_0 = arith.constant 0 : i32
    %c0_i32_1 = arith.constant 0 : i32
    return %c0_i32, %c0_i32_0 : i32, i32
  }
  func.func @transform_9(%arg0: i32) -> (i32, i32) {
    %c0_i32 = arith.constant 0 : i32
    %c0_i32_0 = arith.constant 0 : i32
    return %arg0, %c0_i32 : i32, i32
  }
}

module attributes {stable_mosaic.version = 11 : i64} {
  func.func @fast_attention_kernel(%arg0: i32, %arg1: memref<16x32xbf16, #tpu.memory_space<vmem>>, %arg2: memref<16x4xf32, #tpu.memory_space<vmem>>, %arg3: memref<4x32xf32, #tpu.memory_space<vmem>>, %arg4: memref<32x64xbf16, #tpu.memory_space<vmem>>, %arg5: memref<32x4xbf16, #tpu.memory_space<vmem>>, %arg6: memref<32x4xbf16, #tpu.memory_space<vmem>>, %arg7: memref<32x32xbf16, #tpu.memory_space<vmem>>, %arg8: memref<32x32xbf16, #tpu.memory_space<vmem>>, %arg9: memref<8x32xf32, #tpu.memory_space<vmem>>, %arg10: memref<16x32xf32, #tpu.memory_space<vmem>>, %arg11: memref<16x32xf32, #tpu.memory_space<vmem>>) attributes {dimension_semantics = [#tpu.dimension_semantics<parallel>], iteration_bounds = array<i64: 1>, scalar_prefetch = 0 : i64, scratch_operands = 1 : i64, tpu.core_type = #tpu.core_type<tc>, window_params = [{transform_indices = @transform_0, window_bounds = array<i64: 16, 32>}, {transform_indices = @transform_1, window_bounds = array<i64: 16, 4>}, {pipeline_mode = #tpu.pipeline_mode<synchronous>, transform_indices = @transform_2, window_bounds = array<i64: 4, 32>}, {pipeline_mode = #tpu.pipeline_mode<synchronous>, transform_indices = @transform_3, window_bounds = array<i64: 32, 64>}, {pipeline_mode = #tpu.pipeline_mode<synchronous>, transform_indices = @transform_4, window_bounds = array<i64: 32, 4>}, {pipeline_mode = #tpu.pipeline_mode<synchronous>, transform_indices = @transform_5, window_bounds = array<i64: 32, 4>}, {pipeline_mode = #tpu.pipeline_mode<synchronous>, transform_indices = @transform_6, window_bounds = array<i64: 32, 32>}, {pipeline_mode = #tpu.pipeline_mode<synchronous>, transform_indices = @transform_7, window_bounds = array<i64: 32, 32>}, {pipeline_mode = #tpu.pipeline_mode<synchronous>, transform_indices = @transform_8, window_bounds = array<i64: 8, 32>}, {transform_indices = @transform_9, window_bounds = array<i64: 16, 32>}]} {
    %c0 = arith.constant 0 : index
    %c0_0 = arith.constant 0 : index
    %0 = vector.load %arg3[%c0, %c0_0] : memref<4x32xf32, #tpu.memory_space<vmem>>, vector<4x32xf32>
    %c0_1 = arith.constant 0 : index
    %c0_2 = arith.constant 0 : index
    %1 = vector.load %arg9[%c0_1, %c0_2] : memref<8x32xf32, #tpu.memory_space<vmem>>, vector<8x32xf32>
    %2 = vector.extract_strided_slice %1 {offsets = [0, 0], sizes = [1, 32], strides = [1, 1]} : vector<8x32xf32> to vector<1x32xf32>
    %3 = vector.extract_strided_slice %1 {offsets = [1, 0], sizes = [1, 32], strides = [1, 1]} : vector<8x32xf32> to vector<1x32xf32>
    %4 = vector.extract_strided_slice %1 {offsets = [2, 0], sizes = [1, 4], strides = [1, 1]} : vector<8x32xf32> to vector<1x4xf32>
    %5 = vector.extract_strided_slice %1 {offsets = [3, 0], sizes = [1, 4], strides = [1, 1]} : vector<8x32xf32> to vector<1x4xf32>
    %6 = vector.extract_strided_slice %1 {offsets = [4, 0], sizes = [1, 32], strides = [1, 1]} : vector<8x32xf32> to vector<1x32xf32>
    %7 = vector.extract_strided_slice %1 {offsets = [5, 0], sizes = [1, 32], strides = [1, 1]} : vector<8x32xf32> to vector<1x32xf32>
    %8 = vector.extract_strided_slice %1 {offsets = [6, 0], sizes = [1, 32], strides = [1, 1]} : vector<8x32xf32> to vector<1x32xf32>
    %9 = vector.extract_strided_slice %1 {offsets = [7, 0], sizes = [1, 32], strides = [1, 1]} : vector<8x32xf32> to vector<1x32xf32>
    %c0_3 = arith.constant 0 : index
    %c0_4 = arith.constant 0 : index
    %10 = vector.load %arg1[%c0_3, %c0_4] : memref<16x32xbf16, #tpu.memory_space<vmem>>, vector<16x32xbf16>
    %c0_5 = arith.constant 0 : index
    %c0_6 = arith.constant 0 : index
    %11 = vector.load %arg2[%c0_5, %c0_6] : memref<16x4xf32, #tpu.memory_space<vmem>>, vector<16x4xf32>
    %c0_7 = arith.constant 0 : index
    %c0_8 = arith.constant 0 : index
    %12 = vector.load %arg4[%c0_7, %c0_8] : memref<32x64xbf16, #tpu.memory_space<vmem>>, vector<32x64xbf16>
    %cst = arith.constant dense<0.000000e+00> : vector<16x64xf32>
    %13 = tpu.matmul %10, %12, %cst {dimension_numbers = #tpu.dot_dimension_numbers<[1], [0], [0], [1], [0, 0, 1, 1], [], []>} : vector<16x32xbf16>, vector<32x64xbf16>, vector<16x64xf32> -> vector<16x64xf32>
    %14 = vector.extract_strided_slice %13 {offsets = [0, 0], sizes = [16, 32], strides = [1, 1]} : vector<16x64xf32> to vector<16x32xf32>
    %15 = vector.broadcast %2 : vector<1x32xf32> to vector<16x32xf32>
    %16 = arith.addf %14, %15 : vector<16x32xf32>
    %17 = vector.extract_strided_slice %13 {offsets = [0, 32], sizes = [16, 32], strides = [1, 1]} : vector<16x64xf32> to vector<16x32xf32>
    %18 = vector.broadcast %3 : vector<1x32xf32> to vector<16x32xf32>
    %19 = arith.addf %17, %18 : vector<16x32xf32>
    %20 = arith.truncf %16 : vector<16x32xf32> to vector<16x32xbf16>
    %c0_9 = arith.constant 0 : index
    %c0_10 = arith.constant 0 : index
    %21 = vector.load %arg5[%c0_9, %c0_10] : memref<32x4xbf16, #tpu.memory_space<vmem>>, vector<32x4xbf16>
    %cst_11 = arith.constant dense<0.000000e+00> : vector<16x4xf32>
    %22 = tpu.matmul %20, %21, %cst_11 {dimension_numbers = #tpu.dot_dimension_numbers<[1], [0], [0], [1], [0, 0, 1, 1], [], []>} : vector<16x32xbf16>, vector<32x4xbf16>, vector<16x4xf32> -> vector<16x4xf32>
    %23 = vector.broadcast %4 : vector<1x4xf32> to vector<16x4xf32>
    %24 = arith.addf %22, %23 : vector<16x4xf32>
    %cst_12 = arith.constant 0.353553385 : f32
    %25 = vector.broadcast %cst_12 : f32 to vector<16x4xf32>
    %26 = arith.mulf %24, %25 : vector<16x4xf32>
    %27 = arith.addf %26, %11 : vector<16x4xf32>
    %28 = vector.extract_strided_slice %16 {offsets = [0, 0], sizes = [8, 32], strides = [1, 1]} : vector<16x32xf32> to vector<8x32xf32>
    %29 = vector.extract_strided_slice %20 {offsets = [0, 0], sizes = [8, 32], strides = [1, 1]} : vector<16x32xbf16> to vector<8x32xbf16>
    %30 = vector.extract_strided_slice %19 {offsets = [0, 0], sizes = [8, 32], strides = [1, 1]} : vector<16x32xf32> to vector<8x32xf32>
    %31 = vector.extract_strided_slice %27 {offsets = [0, 0], sizes = [8, 4], strides = [1, 1]} : vector<16x4xf32> to vector<8x4xf32>
    %cst_13 = arith.constant dense<0xFF800000> : vector<4xf32>
    %32 = vector.multi_reduction <maximumf>, %31, %cst_13 [0] : vector<8x4xf32> to vector<4xf32>
    %33 = vector.shape_cast %32 : vector<4xf32> to vector<1x4xf32>
    %34 = vector.broadcast %33 : vector<1x4xf32> to vector<8x4xf32>
    %35 = arith.subf %31, %34 : vector<8x4xf32>
    %36 = math.exp %35 : vector<8x4xf32>
    %cst_14 = arith.constant dense<0.000000e+00> : vector<4xf32>
    %37 = vector.multi_reduction <add>, %36, %cst_14 [0] : vector<8x4xf32> to vector<4xf32>
    %38 = vector.shape_cast %37 : vector<4xf32> to vector<1x4xf32>
    %39 = tpu.reciprocal %38 {approx = true} : vector<1x4xf32> -> vector<1x4xf32>
    %40 = vector.broadcast %39 : vector<1x4xf32> to vector<8x4xf32>
    %41 = arith.mulf %36, %40 : vector<8x4xf32>
    %42 = tpu.transpose %41, [1, 0] : vector<8x4xf32> -> vector<4x8xf32>
    %43 = arith.truncf %42 : vector<4x8xf32> to vector<4x8xbf16>
    %cst_15 = arith.constant dense<0.000000e+00> : vector<4x32xf32>
    %44 = tpu.matmul %43, %29, %cst_15 {dimension_numbers = #tpu.dot_dimension_numbers<[1], [0], [0], [1], [0, 0, 1, 1], [], []>} : vector<4x8xbf16>, vector<8x32xbf16>, vector<4x32xf32> -> vector<4x32xf32>
    %45 = arith.mulf %44, %0 : vector<4x32xf32>
    %cst_16 = arith.constant dense<0.000000e+00> : vector<32xf32>
    %46 = vector.multi_reduction <add>, %45, %cst_16 [0] : vector<4x32xf32> to vector<32xf32>
    %47 = vector.shape_cast %46 : vector<32xf32> to vector<1x32xf32>
    %48 = vector.broadcast %47 : vector<1x32xf32> to vector<8x32xf32>
    %49 = arith.mulf %30, %48 : vector<8x32xf32>
    %50 = arith.truncf %49 : vector<8x32xf32> to vector<8x32xbf16>
    %c0_17 = arith.constant 0 : index
    %c0_18 = arith.constant 0 : index
    %51 = vector.load %arg6[%c0_17, %c0_18] : memref<32x4xbf16, #tpu.memory_space<vmem>>, vector<32x4xbf16>
    %cst_19 = arith.constant dense<0.000000e+00> : vector<8x4xf32>
    %52 = tpu.matmul %50, %51, %cst_19 {dimension_numbers = #tpu.dot_dimension_numbers<[1], [0], [0], [1], [0, 0, 1, 1], [], []>} : vector<8x32xbf16>, vector<32x4xbf16>, vector<8x4xf32> -> vector<8x4xf32>
    %53 = vector.broadcast %5 : vector<1x4xf32> to vector<8x4xf32>
    %54 = arith.addf %52, %53 : vector<8x4xf32>
    %cst_20 = arith.constant 0.353553385 : f32
    %55 = vector.broadcast %cst_20 : f32 to vector<8x4xf32>
    %56 = arith.mulf %54, %55 : vector<8x4xf32>
    %57 = vector.extract_strided_slice %11 {offsets = [0, 0], sizes = [8, 4], strides = [1, 1]} : vector<16x4xf32> to vector<8x4xf32>
    %58 = arith.addf %56, %57 : vector<8x4xf32>
    %cst_21 = arith.constant dense<0xFF800000> : vector<4xf32>
    %59 = vector.multi_reduction <maximumf>, %58, %cst_21 [0] : vector<8x4xf32> to vector<4xf32>
    %60 = vector.shape_cast %59 : vector<4xf32> to vector<1x4xf32>
    %61 = vector.broadcast %60 : vector<1x4xf32> to vector<8x4xf32>
    %62 = arith.subf %58, %61 : vector<8x4xf32>
    %63 = math.exp %62 : vector<8x4xf32>
    %cst_22 = arith.constant dense<0.000000e+00> : vector<4xf32>
    %64 = vector.multi_reduction <add>, %63, %cst_22 [0] : vector<8x4xf32> to vector<4xf32>
    %65 = vector.shape_cast %64 : vector<4xf32> to vector<1x4xf32>
    %66 = tpu.reciprocal %65 {approx = true} : vector<1x4xf32> -> vector<1x4xf32>
    %67 = vector.broadcast %66 : vector<1x4xf32> to vector<8x4xf32>
    %68 = arith.mulf %63, %67 : vector<8x4xf32>
    %69 = tpu.transpose %68, [1, 0] : vector<8x4xf32> -> vector<4x8xf32>
    %70 = arith.truncf %69 : vector<4x8xf32> to vector<4x8xbf16>
    %cst_23 = arith.constant dense<0.000000e+00> : vector<4x32xf32>
    %71 = tpu.matmul %70, %50, %cst_23 {dimension_numbers = #tpu.dot_dimension_numbers<[1], [0], [0], [1], [0, 0, 1, 1], [], []>} : vector<4x8xbf16>, vector<8x32xbf16>, vector<4x32xf32> -> vector<4x32xf32>
    %72 = arith.mulf %71, %0 : vector<4x32xf32>
    %cst_24 = arith.constant dense<0.000000e+00> : vector<32xf32>
    %73 = vector.multi_reduction <add>, %72, %cst_24 [0] : vector<4x32xf32> to vector<32xf32>
    %74 = vector.shape_cast %73 : vector<32xf32> to vector<1x32xf32>
    %75 = vector.broadcast %74 : vector<1x32xf32> to vector<8x32xf32>
    %76 = arith.mulf %75, %28 : vector<8x32xf32>
    %c0_25 = arith.constant 0 : index
    %c0_26 = arith.constant 0 : index
    %77 = vector.load %arg11[%c0_25, %c0_26] : memref<16x32xf32, #tpu.memory_space<vmem>>, vector<8x32xf32>
    tpu.vector_store %arg11[%c0_25, %c0_26], %76 {strides = array<i32>} : memref<16x32xf32, #tpu.memory_space<vmem>>, vector<8x32xf32>,
    %78 = vector.extract_strided_slice %16 {offsets = [8, 0], sizes = [8, 32], strides = [1, 1]} : vector<16x32xf32> to vector<8x32xf32>
    %79 = vector.extract_strided_slice %20 {offsets = [8, 0], sizes = [8, 32], strides = [1, 1]} : vector<16x32xbf16> to vector<8x32xbf16>
    %80 = vector.extract_strided_slice %19 {offsets = [8, 0], sizes = [8, 32], strides = [1, 1]} : vector<16x32xf32> to vector<8x32xf32>
    %81 = vector.extract_strided_slice %27 {offsets = [8, 0], sizes = [8, 4], strides = [1, 1]} : vector<16x4xf32> to vector<8x4xf32>
    %cst_27 = arith.constant dense<0xFF800000> : vector<4xf32>
    %82 = vector.multi_reduction <maximumf>, %81, %cst_27 [0] : vector<8x4xf32> to vector<4xf32>
    %83 = vector.shape_cast %82 : vector<4xf32> to vector<1x4xf32>
    %84 = vector.broadcast %83 : vector<1x4xf32> to vector<8x4xf32>
    %85 = arith.subf %81, %84 : vector<8x4xf32>
    %86 = math.exp %85 : vector<8x4xf32>
    %cst_28 = arith.constant dense<0.000000e+00> : vector<4xf32>
    %87 = vector.multi_reduction <add>, %86, %cst_28 [0] : vector<8x4xf32> to vector<4xf32>
    %88 = vector.shape_cast %87 : vector<4xf32> to vector<1x4xf32>
    %89 = tpu.reciprocal %88 {approx = true} : vector<1x4xf32> -> vector<1x4xf32>
    %90 = vector.broadcast %89 : vector<1x4xf32> to vector<8x4xf32>
    %91 = arith.mulf %86, %90 : vector<8x4xf32>
    %92 = tpu.transpose %91, [1, 0] : vector<8x4xf32> -> vector<4x8xf32>
    %93 = arith.truncf %92 : vector<4x8xf32> to vector<4x8xbf16>
    %cst_29 = arith.constant dense<0.000000e+00> : vector<4x32xf32>
    %94 = tpu.matmul %93, %79, %cst_29 {dimension_numbers = #tpu.dot_dimension_numbers<[1], [0], [0], [1], [0, 0, 1, 1], [], []>} : vector<4x8xbf16>, vector<8x32xbf16>, vector<4x32xf32> -> vector<4x32xf32>
    %95 = arith.mulf %94, %0 : vector<4x32xf32>
    %cst_30 = arith.constant dense<0.000000e+00> : vector<32xf32>
    %96 = vector.multi_reduction <add>, %95, %cst_30 [0] : vector<4x32xf32> to vector<32xf32>
    %97 = vector.shape_cast %96 : vector<32xf32> to vector<1x32xf32>
    %98 = vector.broadcast %97 : vector<1x32xf32> to vector<8x32xf32>
    %99 = arith.mulf %80, %98 : vector<8x32xf32>
    %100 = arith.truncf %99 : vector<8x32xf32> to vector<8x32xbf16>
    %c0_31 = arith.constant 0 : index
    %c0_32 = arith.constant 0 : index
    %101 = vector.load %arg6[%c0_31, %c0_32] : memref<32x4xbf16, #tpu.memory_space<vmem>>, vector<32x4xbf16>
    %cst_33 = arith.constant dense<0.000000e+00> : vector<8x4xf32>
    %102 = tpu.matmul %100, %101, %cst_33 {dimension_numbers = #tpu.dot_dimension_numbers<[1], [0], [0], [1], [0, 0, 1, 1], [], []>} : vector<8x32xbf16>, vector<32x4xbf16>, vector<8x4xf32> -> vector<8x4xf32>
    %103 = vector.broadcast %5 : vector<1x4xf32> to vector<8x4xf32>
    %104 = arith.addf %102, %103 : vector<8x4xf32>
    %cst_34 = arith.constant 0.353553385 : f32
    %105 = vector.broadcast %cst_34 : f32 to vector<8x4xf32>
    %106 = arith.mulf %104, %105 : vector<8x4xf32>
    %107 = vector.extract_strided_slice %11 {offsets = [8, 0], sizes = [8, 4], strides = [1, 1]} : vector<16x4xf32> to vector<8x4xf32>
    %108 = arith.addf %106, %107 : vector<8x4xf32>
    %cst_35 = arith.constant dense<0xFF800000> : vector<4xf32>
    %109 = vector.multi_reduction <maximumf>, %108, %cst_35 [0] : vector<8x4xf32> to vector<4xf32>
    %110 = vector.shape_cast %109 : vector<4xf32> to vector<1x4xf32>
    %111 = vector.broadcast %110 : vector<1x4xf32> to vector<8x4xf32>
    %112 = arith.subf %108, %111 : vector<8x4xf32>
    %113 = math.exp %112 : vector<8x4xf32>
    %cst_36 = arith.constant dense<0.000000e+00> : vector<4xf32>
    %114 = vector.multi_reduction <add>, %113, %cst_36 [0] : vector<8x4xf32> to vector<4xf32>
    %115 = vector.shape_cast %114 : vector<4xf32> to vector<1x4xf32>
    %116 = tpu.reciprocal %115 {approx = true} : vector<1x4xf32> -> vector<1x4xf32>
    %117 = vector.broadcast %116 : vector<1x4xf32> to vector<8x4xf32>
    %118 = arith.mulf %113, %117 : vector<8x4xf32>
    %119 = tpu.transpose %118, [1, 0] : vector<8x4xf32> -> vector<4x8xf32>
    %120 = arith.truncf %119 : vector<4x8xf32> to vector<4x8xbf16>
    %cst_37 = arith.constant dense<0.000000e+00> : vector<4x32xf32>
    %121 = tpu.matmul %120, %100, %cst_37 {dimension_numbers = #tpu.dot_dimension_numbers<[1], [0], [0], [1], [0, 0, 1, 1], [], []>} : vector<4x8xbf16>, vector<8x32xbf16>, vector<4x32xf32> -> vector<4x32xf32>
    %122 = arith.mulf %121, %0 : vector<4x32xf32>
    %cst_38 = arith.constant dense<0.000000e+00> : vector<32xf32>
    %123 = vector.multi_reduction <add>, %122, %cst_38 [0] : vector<4x32xf32> to vector<32xf32>
    %124 = vector.shape_cast %123 : vector<32xf32> to vector<1x32xf32>
    %125 = vector.broadcast %124 : vector<1x32xf32> to vector<8x32xf32>
    %126 = arith.mulf %125, %78 : vector<8x32xf32>
    %c8 = arith.constant 8 : index
    %c0_39 = arith.constant 0 : index
    %127 = vector.load %arg11[%c8, %c0_39] : memref<16x32xf32, #tpu.memory_space<vmem>>, vector<8x32xf32>
    tpu.vector_store %arg11[%c8, %c0_39], %126 {strides = array<i32>} : memref<16x32xf32, #tpu.memory_space<vmem>>, vector<8x32xf32>,
    %c0_40 = arith.constant 0 : index
    %c0_41 = arith.constant 0 : index
    %128 = vector.load %arg11[%c0_40, %c0_41] : memref<16x32xf32, #tpu.memory_space<vmem>>, vector<16x32xf32>
    %129 = arith.truncf %128 : vector<16x32xf32> to vector<16x32xbf16>
    %c0_42 = arith.constant 0 : index
    %c0_43 = arith.constant 0 : index
    %130 = vector.load %arg7[%c0_42, %c0_43] : memref<32x32xbf16, #tpu.memory_space<vmem>>, vector<32x32xbf16>
    %cst_44 = arith.constant dense<0.000000e+00> : vector<16x32xf32>
    %131 = tpu.matmul %129, %130, %cst_44 {dimension_numbers = #tpu.dot_dimension_numbers<[1], [0], [0], [1], [0, 0, 1, 1], [], []>} : vector<16x32xbf16>, vector<32x32xbf16>, vector<16x32xf32> -> vector<16x32xf32>
    %132 = vector.broadcast %6 : vector<1x32xf32> to vector<16x32xf32>
    %133 = arith.addf %131, %132 : vector<16x32xf32>
    %134 = arith.addf %133, %16 : vector<16x32xf32>
    %135 = arith.truncf %134 : vector<16x32xf32> to vector<16x32xbf16>
    %c0_45 = arith.constant 0 : index
    %c0_46 = arith.constant 0 : index
    %136 = vector.load %arg8[%c0_45, %c0_46] : memref<32x32xbf16, #tpu.memory_space<vmem>>, vector<32x32xbf16>
    %cst_47 = arith.constant dense<0.000000e+00> : vector<16x32xf32>
    %137 = tpu.matmul %135, %136, %cst_47 {dimension_numbers = #tpu.dot_dimension_numbers<[1], [0], [0], [1], [0, 0, 1, 1], [], []>} : vector<16x32xbf16>, vector<32x32xbf16>, vector<16x32xf32> -> vector<16x32xf32>
    %138 = vector.broadcast %7 : vector<1x32xf32> to vector<16x32xf32>
    %139 = arith.addf %137, %138 : vector<16x32xf32>
    %140 = arith.extf %10 : vector<16x32xbf16> to vector<16x32xf32>
    %141 = arith.addf %139, %140 : vector<16x32xf32>
    %cst_48 = arith.constant dense<0.000000e+00> : vector<16xf32>
    %142 = vector.multi_reduction <add>, %141, %cst_48 [1] : vector<16x32xf32> to vector<16xf32>
    %143 = vector.shape_cast %142 : vector<16xf32> to vector<16x1xf32>
    %cst_49 = arith.constant 3.200000e+01 : f32
    %144 = vector.broadcast %cst_49 : f32 to vector<16x1xf32>
    %145 = arith.divf %143, %144 : vector<16x1xf32>
    %146 = vector.broadcast %145 : vector<16x1xf32> to vector<16x32xf32>
    %147 = arith.subf %141, %146 : vector<16x32xf32>
    %148 = arith.mulf %147, %147 : vector<16x32xf32>
    %cst_50 = arith.constant dense<0.000000e+00> : vector<16xf32>
    %149 = vector.multi_reduction <add>, %148, %cst_50 [1] : vector<16x32xf32> to vector<16xf32>
    %150 = vector.shape_cast %149 : vector<16xf32> to vector<16x1xf32>
    %cst_51 = arith.constant 3.200000e+01 : f32
    %151 = vector.broadcast %cst_51 : f32 to vector<16x1xf32>
    %152 = arith.divf %150, %151 : vector<16x1xf32>
    %153 = vector.broadcast %145 : vector<16x1xf32> to vector<16x32xf32>
    %154 = arith.subf %141, %153 : vector<16x32xf32>
    %cst_52 = arith.constant 9.99999996E-13 : f32
    %155 = vector.broadcast %cst_52 : f32 to vector<16x1xf32>
    %156 = arith.addf %152, %155 : vector<16x1xf32>
    %157 = math.rsqrt %156 : vector<16x1xf32>
    %158 = vector.broadcast %157 : vector<16x1xf32> to vector<16x32xf32>
    %159 = arith.mulf %154, %158 : vector<16x32xf32>
    %160 = vector.broadcast %8 : vector<1x32xf32> to vector<16x32xf32>
    %161 = arith.mulf %159, %160 : vector<16x32xf32>
    %162 = vector.broadcast %9 : vector<1x32xf32> to vector<16x32xf32>
    %163 = arith.addf %161, %162 : vector<16x32xf32>
    %c0_53 = arith.constant 0 : index
    %c0_54 = arith.constant 0 : index
    %164 = vector.load %arg10[%c0_53, %c0_54] : memref<16x32xf32, #tpu.memory_space<vmem>>, vector<16x32xf32>
    tpu.vector_store %arg10[%c0_53, %c0_54], %163 {strides = array<i32>} : memref<16x32xf32, #tpu.memory_space<vmem>>, vector<16x32xf32>,
    return
  }
  func.func @transform_0(%arg0: i32) -> (i32, i32) {
    %c0_i32 = arith.constant 0 : i32
    %c0_i32_0 = arith.constant 0 : i32
    return %arg0, %c0_i32 : i32, i32
  }
  func.func @transform_1(%arg0: i32) -> (i32, i32) {
    %c0_i32 = arith.constant 0 : i32
    %c0_i32_0 = arith.constant 0 : i32
    return %arg0, %c0_i32 : i32, i32
  }
  func.func @transform_2(%arg0: i32) -> (i32, i32) {
    %c0_i32 = arith.constant 0 : i32
    %c0_i32_0 = arith.constant 0 : i32
    %c0_i32_1 = arith.constant 0 : i32
    return %c0_i32, %c0_i32_0 : i32, i32
  }
  func.func @transform_3(%arg0: i32) -> (i32, i32) {
    %c0_i32 = arith.constant 0 : i32
    %c0_i32_0 = arith.constant 0 : i32
    %c0_i32_1 = arith.constant 0 : i32
    return %c0_i32, %c0_i32_0 : i32, i32
  }
  func.func @transform_4(%arg0: i32) -> (i32, i32) {
    %c0_i32 = arith.constant 0 : i32
    %c0_i32_0 = arith.constant 0 : i32
    %c0_i32_1 = arith.constant 0 : i32
    return %c0_i32, %c0_i32_0 : i32, i32
  }
  func.func @transform_5(%arg0: i32) -> (i32, i32) {
    %c0_i32 = arith.constant 0 : i32
    %c0_i32_0 = arith.constant 0 : i32
    %c0_i32_1 = arith.constant 0 : i32
    return %c0_i32, %c0_i32_0 : i32, i32
  }
  func.func @transform_6(%arg0: i32) -> (i32, i32) {
    %c0_i32 = arith.constant 0 : i32
    %c0_i32_0 = arith.constant 0 : i32
    %c0_i32_1 = arith.constant 0 : i32
    return %c0_i32, %c0_i32_0 : i32, i32
  }
  func.func @transform_7(%arg0: i32) -> (i32, i32) {
    %c0_i32 = arith.constant 0 : i32
    %c0_i32_0 = arith.constant 0 : i32
    %c0_i32_1 = arith.constant 0 : i32
    return %c0_i32, %c0_i32_0 : i32, i32
  }
  func.func @transform_8(%arg0: i32) -> (i32, i32) {
    %c0_i32 = arith.constant 0 : i32
    %c0_i32_0 = arith.constant 0 : i32
    %c0_i32_1 = arith.constant 0 : i32
    return %c0_i32, %c0_i32_0 : i32, i32
  }
  func.func @transform_9(%arg0: i32) -> (i32, i32) {
    %c0_i32 = arith.constant 0 : i32
    %c0_i32_0 = arith.constant 0 : i32
    return %arg0, %c0_i32 : i32, i32
  }
}

</mosaic_0001>

<llo_original>
// kernel: tpu_custom_call.1
$region0: #{tpu_custom_call.1}
  #allocation0 [shape = 'u32[]', space=smem, size = 0x4, offset = 0x4, fixed_abs, tag = 'smem constant byte address 0x4 - core index']
  #allocation1 [shape = 'u32[72,128]{1,0:T(1,128)}', space=vmem, size = 0x9000, scoped, tag = 'internal scratch']
  #allocation2 [shape = 'f32[16,32]{1,0:T(8,128)}', space=vmem, size = 0x2000, scoped, tag = 'scratch operand']
  %s0 = inlined_call_operand.hbm [shape: bf16[16,32], index: 0, kind: input, shape index: {}]
  %s1 = inlined_call_operand.vmem [shape: f32[16,4], index: 1, kind: input, shape index: {}]
  %s2 = inlined_call_operand.hbm [shape: f32[4,32], index: 2, kind: input, shape index: {}]
  %s3 = inlined_call_operand.vmem [shape: bf16[32,64], index: 3, kind: input, shape index: {}]
  %s4 = inlined_call_operand.vmem [shape: bf16[32,4], index: 4, kind: input, shape index: {}]
  %s5 = inlined_call_operand.vmem [shape: bf16[32,4], index: 5, kind: input, shape index: {}]
  %s6 = inlined_call_operand.vmem [shape: bf16[32,32], index: 6, kind: input, shape index: {}]
  %s7 = inlined_call_operand.vmem [shape: bf16[32,32], index: 7, kind: input, shape index: {}]
  %s8 = inlined_call_operand.vmem [shape: f32[8,32], index: 8, kind: input, shape index: {}]
  %s9 = inlined_call_operand.hbm [shape: f32[16,32], index: 9, kind: output, shape index: {}]
  %s10 = sld [smem:[#allocation0]]
  $region54: #{tpu_custom_call.1} parent=0
    _
  %s12 = ssub.s32 1, %s10
  %s13 = scalar_select 0, %s12, %s10
  $region1: #{tpu_custom_call.1} parent=0
    #allocation3 [shape = 'u8[4096]{0}', space=vmem, size = 0x1000, scoped, tag = 'input window, operand 0, single buffered']
    #allocation4 [shape = 's32[1]{0}', space=sflag, size = 0x4, scoped, tag = 'scoped memory for tpu_custom_call.1']
    #allocation5 [shape = 's32[1]{0}', space=sflag, size = 0x4, scoped, tag = 'scoped memory for tpu_custom_call.1']
    #allocation6 [shape = 'u8[2048]{0}', space=vmem, size = 0x800, scoped, tag = 'input window, operand 2, single buffered']
    #allocation7 [shape = 's32[1]{0}', space=sflag, size = 0x4, scoped, tag = 'scoped memory for tpu_custom_call.1']
    #allocation8 [shape = 'u8[8192]{0}', space=vmem, size = 0x2000, scoped, tag = 'output window, operand 0, single buffered']
    %14 = vsyncpa [#allocation4], 0
    %15 = vsyncpa [#allocation7], 0
    %16 = vsyncpa [#allocation5], 0
    // Predicated region
    $region2: #{tpu_custom_call.1} parent=1 // pred_check
      _
    $region3: #{tpu_custom_call.1} parent=1 // pred_check_branch
      %18 = sbr.rel (0) target = $region5
    $region4: #{tpu_custom_call.1} parent=1 // pred_region
      %20 = vsyncadd [#allocation4], 0
      %s21 = sshll.u32 %s0, 4
      %s22 = int_to_ptr.hbm [resolvable:$true] %s21
      %s23 = sshll.u32 [#allocation3], 4
      %s24 = int_to_ptr.vmem [resolvable:$true] %s23
      %29 = dma.hbm_to_vmem [thread:$0]  %s22, 128, %s24, [#allocation4], 64, 64, 4
    $region5: #{tpu_custom_call.1} parent=1 // pred_fallthru
      _
    // Predicated region
    $region6: #{tpu_custom_call.1} parent=1 // pred_check
      _
    $region7: #{tpu_custom_call.1} parent=1 // pred_check_branch
      %31 = sbr.rel (0) target = $region9
    $region8: #{tpu_custom_call.1} parent=1 // pred_region
      _
    $region9: #{tpu_custom_call.1} parent=1 // pred_fallthru
      _
    // Predicated region
    $region10: #{tpu_custom_call.1} parent=1 // pred_check
      _
    $region11: #{tpu_custom_call.1} parent=1 // pred_check_branch
      %33 = sbr.rel (0) target = $region13
    $region12: #{tpu_custom_call.1} parent=1 // pred_region
      %35 = vsyncadd [#allocation7], 0
      %s37 = sshll.u32 %s2, 4
      %s38 = int_to_ptr.hbm [resolvable:$true] %s37
      %s39 = sshll.u32 [#allocation6], 4
      %s40 = int_to_ptr.vmem [resolvable:$true] %s39
      %42 = dma.hbm_to_vmem [thread:$0]  %s38, 64, %s40, [#allocation7]
    $region13: #{tpu_custom_call.1} parent=1 // pred_fallthru
      _
    // Predicated region
    $region14: #{tpu_custom_call.1} parent=1 // pred_check
      _
    $region15: #{tpu_custom_call.1} parent=1 // pred_check_branch
      %44 = sbr.rel (0) target = $region17
    $region16: #{tpu_custom_call.1} parent=1 // pred_region
      _
    $region17: #{tpu_custom_call.1} parent=1 // pred_fallthru
      _
    // Predicated region
    $region18: #{tpu_custom_call.1} parent=1 // pred_check
      _
    $region19: #{tpu_custom_call.1} parent=1 // pred_check_branch
      %46 = sbr.rel (0) target = $region21
    $region20: #{tpu_custom_call.1} parent=1 // pred_region
      _
    $region21: #{tpu_custom_call.1} parent=1 // pred_fallthru
      _
    // Predicated region
    $region22: #{tpu_custom_call.1} parent=1 // pred_check
      _
    $region23: #{tpu_custom_call.1} parent=1 // pred_check_branch
      %48 = sbr.rel (0) target = $region25
    $region24: #{tpu_custom_call.1} parent=1 // pred_region
      _
    $region25: #{tpu_custom_call.1} parent=1 // pred_fallthru
      _
    // Predicated region
    $region26: #{tpu_custom_call.1} parent=1 // pred_check
      _
    $region27: #{tpu_custom_call.1} parent=1 // pred_check_branch
      %50 = sbr.rel (0) target = $region29
    $region28: #{tpu_custom_call.1} parent=1 // pred_region
      _
    $region29: #{tpu_custom_call.1} parent=1 // pred_fallthru
      _
    // Predicated region
    $region30: #{tpu_custom_call.1} parent=1 // pred_check
      _
    $region31: #{tpu_custom_call.1} parent=1 // pred_check_branch
      %52 = sbr.rel (0) target = $region33
    $region32: #{tpu_custom_call.1} parent=1 // pred_region
      _
    $region33: #{tpu_custom_call.1} parent=1 // pred_fallthru
      _
    // Predicated region
    $region34: #{tpu_custom_call.1} parent=1 // pred_check
      _
    $region35: #{tpu_custom_call.1} parent=1 // pred_check_branch
      %54 = sbr.rel (0) target = $region37
    $region36: #{tpu_custom_call.1} parent=1 // pred_region
      _
    $region37: #{tpu_custom_call.1} parent=1 // pred_fallthru
      _
    // Predicated region
    $region38: #{tpu_custom_call.1} parent=1 // pred_check
      _
    $region39: #{tpu_custom_call.1} parent=1 // pred_check_branch
      %56 = sbr.rel (0) target = $region41
    $region40: #{tpu_custom_call.1} parent=1 // pred_region
      %58 = dma.done [#allocation4], 128
    $region41: #{tpu_custom_call.1} parent=1 // pred_fallthru
      _
    // Predicated region
    $region42: #{tpu_custom_call.1} parent=1 // pred_check
      _
    $region43: #{tpu_custom_call.1} parent=1 // pred_check_branch
      %60 = sbr.rel (0) target = $region45
    $region44: #{tpu_custom_call.1} parent=1 // pred_region
      %62 = dma.done [#allocation7], 64
    $region45: #{tpu_custom_call.1} parent=1 // pred_fallthru
      _
    %v64 = vld [vmem:[#allocation6] sm:$0xf]
    %v65 = vld [vmem:[%s8] sm:$0xff]
    %v66 = vld [vmem:[#allocation3] sm:$0xf]
    %v67 = vld [vmem:[#allocation3 + $0x4] sm:$0xf]
    %v68 = vld [vmem:[%s1] sm:$0xff]
    %v69 = vld [vmem:[%s1 + $0x8] sm:$0xff]
    %v70 = vld [vmem:[%s3] sm:$0xf]
    %v71 = vld [vmem:[%s3 + $0x4] sm:$0xf]
    %v72 = vld [vmem:[%s3 + $0x8] sm:$0xf]
    %v73 = vld [vmem:[%s3 + $0xc] sm:$0xf]
    %v76 = vunpack.c.l.b16 %v66
    %v77 = vunpack.c.l.b16 %v67
    %v78 = vpack.c.b16 %v77, %v76
    %v83 = vunpack.c.l.b16 %v70
    %v84 = vunpack.c.l.b16 %v71
    %v85 = vunpack.c.l.b16 %v72
    %v86 = vunpack.c.l.b16 %v73
    %v87 = vpack.c.b16 %v84, %v83
    %v88 = vpack.c.b16 %v86, %v85
    %vm91 = vcmask 261120
    %v93 = vsel %vm91, %v78, 0
    %95 = vmatpush.bf16.msra.mxu0 0
    %96 = vmatpush.bf16.msra.mxu0 0
    %97 = vmatpush.bf16.msra.mxu0 0
    %98 = vmatpush.bf16.msra.mxu0 0
    %99 = vmatpush.bf16.msra.mxu0 0
    %100 = vmatpush.bf16.msra.mxu0 0
    %101 = vmatpush.bf16.msra.mxu0 %v88
    %102 = vmatpush.bf16.msra.mxu0 %v87
    %103 = vmatmul.bf16.gmra.mxu0 %v93
    %v104 = vpop.f32.mrf.mxu0
    %v105 = vadd.f32 0.0, %v104
    %v106 = vpop.f32.mrf.mxu0
    %v107 = vadd.f32 0.0, %v106
    %108 = vdwg.mxu0
    %v109 = vperm.slane %v65, 0
    %v110 = vadd.f32 %v105, %v109
    %v111 = vadd.f32 %v107, %v109
    %v112 = vperm.slane %v65, 1
    %114 = vrot.lane.b32.xlu0 %v112, 32
    %v115 = vpop.permute.xlu0 %114
    %v117 = vadd.f32 %v105, %v115
    %v118 = vadd.f32 %v107, %v115
    %v119 = vpack.c.bf16 %v110, %v110
    %v120 = vpack.c.bf16 %v111, %v111
    %v121 = vld [vmem:[%s4] sm:$0xf]
    %v122 = vld [vmem:[%s4 + $0x4] sm:$0xf]
    %v123 = vld [vmem:[%s4 + $0x8] sm:$0xf]
    %v124 = vld [vmem:[%s4 + $0xc] sm:$0xf]
    %v125 = vperm.slane %v65, 2
    %v128 = vunpack.c.l.b16 %v119
    %v129 = vunpack.c.l.b16 %v120
    %v130 = vpack.c.b16 %v129, %v128
    %v135 = vunpack.c.l.b16 %v121
    %v136 = vunpack.c.l.b16 %v122
    %v137 = vunpack.c.l.b16 %v123
    %v138 = vunpack.c.l.b16 %v124
    %v139 = vpack.c.b16 %v136, %v135
    %v140 = vpack.c.b16 %v138, %v137
    %v144 = vsel %vm91, %v130, 0
    %146 = vmatpush.bf16.msra.mxu0 0
    %147 = vmatpush.bf16.msra.mxu0 0
    %148 = vmatpush.bf16.msra.mxu0 0
    %149 = vmatpush.bf16.msra.mxu0 0
    %150 = vmatpush.bf16.msra.mxu0 0
    %151 = vmatpush.bf16.msra.mxu0 0
    %152 = vmatpush.bf16.msra.mxu0 %v140
    %153 = vmatpush.bf16.msra.mxu0 %v139
    %154 = vmatmul.bf16.gmra.mxu0 %v144
    %v155 = vpop.f32.mrf.mxu0
    %v156 = vadd.f32 %v125, %v155
    %v157 = vpop.f32.mrf.mxu0
    %v158 = vadd.f32 %v125, %v157
    %159 = vdwg.mxu0
    %v160 = vmul.f32 %v156, 0.35355338
    %v161 = vmul.f32 %v158, 0.35355338
    %v162 = vadd.f32 %v160, %v68
    %v163 = vadd.f32 %v161, %v69
    %vm164 = vcmask 31744
    %v165 = vsel %vm164, %v162, -inf
    %v166 = vrot.slane %v165, 4
    %v167 = vmax.f32 %v165, %v166
    %v168 = vrot.slane %v167, 2
    %v169 = vmax.f32 %v167, %v168
    %v170 = vrot.slane %v169, 1
    %v171 = vmax.f32 %v169, %v170
    %v172 = vsub.f32 %v162, %v171
    %v173 = vmul.f32 %v172, 1.442695
    %v174 = vpow.pop %v173
    %v175 = vsel %vm164, %v174, 0.0
    %v176 = vrot.slane %v175, 4
    %v177 = vadd.f32 %v175, %v176
    %v178 = vrot.slane %v177, 2
    %v179 = vadd.f32 %v177, %v178
    %v180 = vrot.slane %v179, 1
    %v181 = vadd.f32 %v179, %v180
    %v182 = vrcp.pop %v181
    %v183 = vmul.f32 %v174, %v182
    %184 = vxpose.xlu0.b32.start [1/16] %v183, 128
    %185 = vxpose.xlu0.b32.cont [2/16] 0.0, 128
    %186 = vxpose.xlu0.b32.cont [3/16] 0.0, 128
    %187 = vxpose.xlu0.b32.cont [4/16] 0.0, 128
    %188 = vxpose.xlu0.b32.cont [5/16] 0.0, 128
    %189 = vxpose.xlu0.b32.cont [6/16] 0.0, 128
    %190 = vxpose.xlu0.b32.cont [7/16] 0.0, 128
    %191 = vxpose.xlu0.b32.cont [8/16] 0.0, 128
    %192 = vxpose.xlu0.b32.cont [9/16] 0.0, 128
    %193 = vxpose.xlu0.b32.cont [10/16] 0.0, 128
    %194 = vxpose.xlu0.b32.cont [11/16] 0.0, 128
    %195 = vxpose.xlu0.b32.cont [12/16] 0.0, 128
    %196 = vxpose.xlu0.b32.cont [13/16] 0.0, 128
    %197 = vxpose.xlu0.b32.cont [14/16] 0.0, 128
    %198 = vxpose.xlu0.b32.cont [15/16] 0.0, 128
    %199 = vxpose.xlu0.b32.end [16/16] 0.0, 128
    %v200 = vpop.trf.xlu0
    %v201 = vpop.trf.xlu0
    %v202 = vpop.trf.xlu0
    %v203 = vpop.trf.xlu0
    %v204 = vpop.trf.xlu0
    %v205 = vpop.trf.xlu0
    %v206 = vpop.trf.xlu0
    %v207 = vpop.trf.xlu0
    %v208 = vpop.trf.xlu0
    %v209 = vpop.trf.xlu0
    %v210 = vpop.trf.xlu0
    %v211 = vpop.trf.xlu0
    %v212 = vpop.trf.xlu0
    %v213 = vpop.trf.xlu0
    %v214 = vpop.trf.xlu0
    %v215 = vpop.trf.xlu0
    %v216 = vpack.c.bf16 %v200, %v200
    %vm217 = vcmask 64512
    %v219 = vsel %vm217, %v216, 0
    %vm221 = vcmask 1043456
    %v223 = vsel %vm221, %v119, 0
    %225 = vmatpush.bf16.msra.mxu0 0
    %226 = vmatpush.bf16.msra.mxu0 0
    %227 = vmatpush.bf16.msra.mxu0 0
    %228 = vmatpush.bf16.msra.mxu0 0
    %229 = vmatpush.bf16.msra.mxu0 0
    %230 = vmatpush.bf16.msra.mxu0 0
    %231 = vmatpush.bf16.msra.mxu0 0
    %232 = vmatpush.bf16.msra.mxu0 %v223
    %233 = vmatmul.bf16.gmra.mxu0 %v219
    %v234 = vpop.f32.mrf.mxu0
    %v235 = vadd.f32 0.0, %v234
    %v236 = vpop.f32.mrf.mxu0
    %237 = vdwg.mxu0
    %v238 = vmul.f32 %v235, %v64
    %vm239 = vcmask 257024
    %v240 = vsel %vm239, %v238, 0.0
    %v241 = vrot.slane %v240, 4
    %v242 = vadd.f32 %v240, %v241
    %v243 = vrot.slane %v242, 2
    %v244 = vadd.f32 %v242, %v243
    %v245 = vrot.slane %v244, 1
    %v246 = vadd.f32 %v244, %v245
    %248 = vrot.lane.b32.xlu0 %v246, 32
    %v249 = vpop.permute.xlu0 %248
    %v251 = vmul.f32 %v117, %v249
    %v252 = vpack.c.bf16 %v251, %v251
    %v253 = vld [vmem:[%s5] sm:$0xf]
    %v254 = vld [vmem:[%s5 + $0x4] sm:$0xf]
    %v255 = vld [vmem:[%s5 + $0x8] sm:$0xf]
    %v256 = vld [vmem:[%s5 + $0xc] sm:$0xf]
    %v257 = vperm.slane %v65, 3
    %259 = vrot.lane.b32.xlu0 %v252, 96
    %v260 = vpop.permute.xlu0 %259
    %v265 = vunpack.c.l.b16 %v253
    %v266 = vunpack.c.l.b16 %v254
    %v267 = vunpack.c.l.b16 %v255
    %v268 = vunpack.c.l.b16 %v256
    %v269 = vpack.c.b16 %v266, %v265
    %v270 = vpack.c.b16 %v268, %v267
    %v274 = vsel %vm91, %v260, 0
    %276 = vmatpush.bf16.msra.mxu0 0
    %277 = vmatpush.bf16.msra.mxu0 0
    %278 = vmatpush.bf16.msra.mxu0 0
    %279 = vmatpush.bf16.msra.mxu0 0
    %280 = vmatpush.bf16.msra.mxu0 0
    %281 = vmatpush.bf16.msra.mxu0 0
    %282 = vmatpush.bf16.msra.mxu0 %v270
    %283 = vmatpush.bf16.msra.mxu0 %v269
    %284 = vmatmul.bf16.gmra.mxu0 %v274
    %v285 = vpop.f32.mrf.mxu0
    %v286 = vadd.f32 %v257, %v285
    %v287 = vpop.f32.mrf.mxu0
    %288 = vdwg.mxu0
    %v289 = vmul.f32 %v286, 0.35355338
    %v290 = vadd.f32 %v289, %v68
    %v291 = vsel %vm164, %v290, -inf
    %v292 = vrot.slane %v291, 4
    %v293 = vmax.f32 %v291, %v292
    %v294 = vrot.slane %v293, 2
    %v295 = vmax.f32 %v293, %v294
    %v296 = vrot.slane %v295, 1
    %v297 = vmax.f32 %v295, %v296
    %v298 = vsub.f32 %v290, %v297
    %v299 = vmul.f32 %v298, 1.442695
    %v300 = vpow.pop %v299
    %v301 = vsel %vm164, %v300, 0.0
    %v302 = vrot.slane %v301, 4
    %v303 = vadd.f32 %v301, %v302
    %v304 = vrot.slane %v303, 2
    %v305 = vadd.f32 %v303, %v304
    %v306 = vrot.slane %v305, 1
    %v307 = vadd.f32 %v305, %v306
    %v308 = vrcp.pop %v307
    %v309 = vmul.f32 %v300, %v308
    %310 = vxpose.xlu0.b32.start [1/16] %v309, 128
    %311 = vxpose.xlu0.b32.cont [2/16] 0.0, 128
    %312 = vxpose.xlu0.b32.cont [3/16] 0.0, 128
    %313 = vxpose.xlu0.b32.cont [4/16] 0.0, 128
    %314 = vxpose.xlu0.b32.cont [5/16] 0.0, 128
    %315 = vxpose.xlu0.b32.cont [6/16] 0.0, 128
    %316 = vxpose.xlu0.b32.cont [7/16] 0.0, 128
    %317 = vxpose.xlu0.b32.cont [8/16] 0.0, 128
    %318 = vxpose.xlu0.b32.cont [9/16] 0.0, 128
    %319 = vxpose.xlu0.b32.cont [10/16] 0.0, 128
    %320 = vxpose.xlu0.b32.cont [11/16] 0.0, 128
    %321 = vxpose.xlu0.b32.cont [12/16] 0.0, 128
    %322 = vxpose.xlu0.b32.cont [13/16] 0.0, 128
    %323 = vxpose.xlu0.b32.cont [14/16] 0.0, 128
    %324 = vxpose.xlu0.b32.cont [15/16] 0.0, 128
    %325 = vxpose.xlu0.b32.end [16/16] 0.0, 128
    %v326 = vpop.trf.xlu0
    %v327 = vpop.trf.xlu0
    %v328 = vpop.trf.xlu0
    %v329 = vpop.trf.xlu0
    %v330 = vpop.trf.xlu0
    %v331 = vpop.trf.xlu0
    %v332 = vpop.trf.xlu0
    %v333 = vpop.trf.xlu0
    %v334 = vpop.trf.xlu0
    %v335 = vpop.trf.xlu0
    %v336 = vpop.trf.xlu0
    %v337 = vpop.trf.xlu0
    %v338 = vpop.trf.xlu0
    %v339 = vpop.trf.xlu0
    %v340 = vpop.trf.xlu0
    %v341 = vpop.trf.xlu0
    %v342 = vpack.c.bf16 %v326, %v326
    %v344 = vsel %vm217, %v342, 0
    %v346 = vsel %vm221, %v260, 0
    %348 = vmatpush.bf16.msra.mxu0 0
    %349 = vmatpush.bf16.msra.mxu0 0
    %350 = vmatpush.bf16.msra.mxu0 0
    %351 = vmatpush.bf16.msra.mxu0 0
    %352 = vmatpush.bf16.msra.mxu0 0
    %353 = vmatpush.bf16.msra.mxu0 0
    %354 = vmatpush.bf16.msra.mxu0 0
    %355 = vmatpush.bf16.msra.mxu0 %v346
    %356 = vmatmul.bf16.gmra.mxu0 %v344
    %v357 = vpop.f32.mrf.mxu0
    %v358 = vadd.f32 0.0, %v357
    %v359 = vpop.f32.mrf.mxu0
    %360 = vdwg.mxu0
    %v361 = vmul.f32 %v358, %v64
    %v362 = vsel %vm239, %v361, 0.0
    %v363 = vrot.slane %v362, 4
    %v364 = vadd.f32 %v362, %v363
    %v365 = vrot.slane %v364, 2
    %v366 = vadd.f32 %v364, %v365
    %v367 = vrot.slane %v366, 1
    %v368 = vadd.f32 %v366, %v367
    %v369 = vmul.f32 %v368, %v110
    %370 = vst.msk [vmem:[#allocation2] sm:$0xff] %vm91, %v369
    %v371 = vsel %vm164, %v163, -inf
    %v372 = vrot.slane %v371, 4
    %v373 = vmax.f32 %v371, %v372
    %v374 = vrot.slane %v373, 2
    %v375 = vmax.f32 %v373, %v374
    %v376 = vrot.slane %v375, 1
    %v377 = vmax.f32 %v375, %v376
    %v378 = vsub.f32 %v163, %v377
    %v379 = vmul.f32 %v378, 1.442695
    %v380 = vpow.pop %v379
    %v381 = vsel %vm164, %v380, 0.0
    %v382 = vrot.slane %v381, 4
    %v383 = vadd.f32 %v381, %v382
    %v384 = vrot.slane %v383, 2
    %v385 = vadd.f32 %v383, %v384
    %v386 = vrot.slane %v385, 1
    %v387 = vadd.f32 %v385, %v386
    %v388 = vrcp.pop %v387
    %v389 = vmul.f32 %v380, %v388
    %390 = vxpose.xlu0.b32.start [1/16] %v389, 128
    %391 = vxpose.xlu0.b32.cont [2/16] 0.0, 128
    %392 = vxpose.xlu0.b32.cont [3/16] 0.0, 128
    %393 = vxpose.xlu0.b32.cont [4/16] 0.0, 128
    %394 = vxpose.xlu0.b32.cont [5/16] 0.0, 128
    %395 = vxpose.xlu0.b32.cont [6/16] 0.0, 128
    %396 = vxpose.xlu0.b32.cont [7/16] 0.0, 128
    %397 = vxpose.xlu0.b32.cont [8/16] 0.0, 128
    %398 = vxpose.xlu0.b32.cont [9/16] 0.0, 128
    %399 = vxpose.xlu0.b32.cont [10/16] 0.0, 128
    %400 = vxpose.xlu0.b32.cont [11/16] 0.0, 128
    %401 = vxpose.xlu0.b32.cont [12/16] 0.0, 128
    %402 = vxpose.xlu0.b32.cont [13/16] 0.0, 128
    %403 = vxpose.xlu0.b32.cont [14/16] 0.0, 128
    %404 = vxpose.xlu0.b32.cont [15/16] 0.0, 128
    %405 = vxpose.xlu0.b32.end [16/16] 0.0, 128
    %v406 = vpop.trf.xlu0
    %v407 = vpop.trf.xlu0
    %v408 = vpop.trf.xlu0
    %v409 = vpop.trf.xlu0
    %v410 = vpop.trf.xlu0
    %v411 = vpop.trf.xlu0
    %v412 = vpop.trf.xlu0
    %v413 = vpop.trf.xlu0
    %v414 = vpop.trf.xlu0
    %v415 = vpop.trf.xlu0
    %v416 = vpop.trf.xlu0
    %v417 = vpop.trf.xlu0
    %v418 = vpop.trf.xlu0
    %v419 = vpop.trf.xlu0
    %v420 = vpop.trf.xlu0
    %v421 = vpop.trf.xlu0
    %v422 = vpack.c.bf16 %v406, %v406
    %v424 = vsel %vm217, %v422, 0
    %v427 = vsel %vm221, %v120, 0
    %429 = vmatpush.bf16.msra.mxu0 0
    %430 = vmatpush.bf16.msra.mxu0 0
    %431 = vmatpush.bf16.msra.mxu0 0
    %432 = vmatpush.bf16.msra.mxu0 0
    %433 = vmatpush.bf16.msra.mxu0 0
    %434 = vmatpush.bf16.msra.mxu0 0
    %435 = vmatpush.bf16.msra.mxu0 0
    %436 = vmatpush.bf16.msra.mxu0 %v427
    %437 = vmatmul.bf16.gmra.mxu0 %v424
    %v438 = vpop.f32.mrf.mxu0
    %v439 = vadd.f32 0.0, %v438
    %v440 = vpop.f32.mrf.mxu0
    %441 = vdwg.mxu0
    %v442 = vmul.f32 %v439, %v64
    %v443 = vsel %vm239, %v442, 0.0
    %v444 = vrot.slane %v443, 4
    %v445 = vadd.f32 %v443, %v444
    %v446 = vrot.slane %v445, 2
    %v447 = vadd.f32 %v445, %v446
    %v448 = vrot.slane %v447, 1
    %v449 = vadd.f32 %v447, %v448
    %451 = vrot.lane.b32.xlu0 %v449, 32
    %v452 = vpop.permute.xlu0 %451
    %v454 = vmul.f32 %v118, %v452
    %v455 = vpack.c.bf16 %v454, %v454
    %v456 = vld [vmem:[%s5] sm:$0xf]
    %v457 = vld [vmem:[%s5 + $0x4] sm:$0xf]
    %v458 = vld [vmem:[%s5 + $0x8] sm:$0xf]
    %v459 = vld [vmem:[%s5 + $0xc] sm:$0xf]
    %461 = vrot.lane.b32.xlu0 %v455, 96
    %v462 = vpop.permute.xlu0 %461
    %v467 = vunpack.c.l.b16 %v456
    %v468 = vunpack.c.l.b16 %v457
    %v469 = vunpack.c.l.b16 %v458
    %v470 = vunpack.c.l.b16 %v459
    %v471 = vpack.c.b16 %v468, %v467
    %v472 = vpack.c.b16 %v470, %v469
    %v476 = vsel %vm91, %v462, 0
    %478 = vmatpush.bf16.msra.mxu0 0
    %479 = vmatpush.bf16.msra.mxu0 0
    %480 = vmatpush.bf16.msra.mxu0 0
    %481 = vmatpush.bf16.msra.mxu0 0
    %482 = vmatpush.bf16.msra.mxu0 0
    %483 = vmatpush.bf16.msra.mxu0 0
    %484 = vmatpush.bf16.msra.mxu0 %v472
    %485 = vmatpush.bf16.msra.mxu0 %v471
    %486 = vmatmul.bf16.gmra.mxu0 %v476
    %v487 = vpop.f32.mrf.mxu0
    %v488 = vadd.f32 %v257, %v487
    %v489 = vpop.f32.mrf.mxu0
    %490 = vdwg.mxu0
    %v491 = vmul.f32 %v488, 0.35355338
    %v492 = vadd.f32 %v491, %v69
    %v493 = vsel %vm164, %v492, -inf
    %v494 = vrot.slane %v493, 4
    %v495 = vmax.f32 %v493, %v494
    %v496 = vrot.slane %v495, 2
    %v497 = vmax.f32 %v495, %v496
    %v498 = vrot.slane %v497, 1
    %v499 = vmax.f32 %v497, %v498
    %v500 = vsub.f32 %v492, %v499
    %v501 = vmul.f32 %v500, 1.442695
    %v502 = vpow.pop %v501
    %v503 = vsel %vm164, %v502, 0.0
    %v504 = vrot.slane %v503, 4
    %v505 = vadd.f32 %v503, %v504
    %v506 = vrot.slane %v505, 2
    %v507 = vadd.f32 %v505, %v506
    %v508 = vrot.slane %v507, 1
    %v509 = vadd.f32 %v507, %v508
    %v510 = vrcp.pop %v509
    %v511 = vmul.f32 %v502, %v510
    %512 = vxpose.xlu0.b32.start [1/16] %v511, 128
    %513 = vxpose.xlu0.b32.cont [2/16] 0.0, 128
    %514 = vxpose.xlu0.b32.cont [3/16] 0.0, 128
    %515 = vxpose.xlu0.b32.cont [4/16] 0.0, 128
    %516 = vxpose.xlu0.b32.cont [5/16] 0.0, 128
    %517 = vxpose.xlu0.b32.cont [6/16] 0.0, 128
    %518 = vxpose.xlu0.b32.cont [7/16] 0.0, 128
    %519 = vxpose.xlu0.b32.cont [8/16] 0.0, 128
    %520 = vxpose.xlu0.b32.cont [9/16] 0.0, 128
    %521 = vxpose.xlu0.b32.cont [10/16] 0.0, 128
    %522 = vxpose.xlu0.b32.cont [11/16] 0.0, 128
    %523 = vxpose.xlu0.b32.cont [12/16] 0.0, 128
    %524 = vxpose.xlu0.b32.cont [13/16] 0.0, 128
    %525 = vxpose.xlu0.b32.cont [14/16] 0.0, 128
    %526 = vxpose.xlu0.b32.cont [15/16] 0.0, 128
    %527 = vxpose.xlu0.b32.end [16/16] 0.0, 128
    %v528 = vpop.trf.xlu0
    %v529 = vpop.trf.xlu0
    %v530 = vpop.trf.xlu0
    %v531 = vpop.trf.xlu0
    %v532 = vpop.trf.xlu0
    %v533 = vpop.trf.xlu0
    %v534 = vpop.trf.xlu0
    %v535 = vpop.trf.xlu0
    %v536 = vpop.trf.xlu0
    %v537 = vpop.trf.xlu0
    %v538 = vpop.trf.xlu0
    %v539 = vpop.trf.xlu0
    %v540 = vpop.trf.xlu0
    %v541 = vpop.trf.xlu0
    %v542 = vpop.trf.xlu0
    %v543 = vpop.trf.xlu0
    %v544 = vpack.c.bf16 %v528, %v528
    %v546 = vsel %vm217, %v544, 0
    %v548 = vsel %vm221, %v462, 0
    %550 = vmatpush.bf16.msra.mxu0 0
    %551 = vmatpush.bf16.msra.mxu0 0
    %552 = vmatpush.bf16.msra.mxu0 0
    %553 = vmatpush.bf16.msra.mxu0 0
    %554 = vmatpush.bf16.msra.mxu0 0
    %555 = vmatpush.bf16.msra.mxu0 0
    %556 = vmatpush.bf16.msra.mxu0 0
    %557 = vmatpush.bf16.msra.mxu0 %v548
    %558 = vmatmul.bf16.gmra.mxu0 %v546
    %v559 = vpop.f32.mrf.mxu0
    %v560 = vadd.f32 0.0, %v559
    %v561 = vpop.f32.mrf.mxu0
    %562 = vdwg.mxu0
    %v563 = vmul.f32 %v560, %v64
    %v564 = vsel %vm239, %v563, 0.0
    %v565 = vrot.slane %v564, 4
    %v566 = vadd.f32 %v564, %v565
    %v567 = vrot.slane %v566, 2
    %v568 = vadd.f32 %v566, %v567
    %v569 = vrot.slane %v568, 1
    %v570 = vadd.f32 %v568, %v569
    %v571 = vmul.f32 %v570, %v111
    %572 = vst.msk [vmem:[#allocation2 + $0x8] sm:$0xff] %vm91, %v571
    %v573 = vld [vmem:[#allocation2] sm:$0xff]
    %v574 = vld [vmem:[#allocation2 + $0x8] sm:$0xff]
    %v575 = vpack.c.bf16 %v574, %v573
    %v576 = vld [vmem:[%s6] sm:$0xf]
    %v577 = vld [vmem:[%s6 + $0x4] sm:$0xf]
    %v578 = vld [vmem:[%s6 + $0x8] sm:$0xf]
    %v579 = vld [vmem:[%s6 + $0xc] sm:$0xf]
    %v580 = vperm.slane %v65, 4
    %v585 = vunpack.c.l.b16 %v576
    %v586 = vunpack.c.l.b16 %v577
    %v587 = vunpack.c.l.b16 %v578
    %v588 = vunpack.c.l.b16 %v579
    %v589 = vpack.c.b16 %v586, %v585
    %v590 = vpack.c.b16 %v588, %v587
    %v594 = vsel %vm91, %v575, 0
    %596 = vmatpush.bf16.msra.mxu0 0
    %597 = vmatpush.bf16.msra.mxu0 0
    %598 = vmatpush.bf16.msra.mxu0 0
    %599 = vmatpush.bf16.msra.mxu0 0
    %600 = vmatpush.bf16.msra.mxu0 0
    %601 = vmatpush.bf16.msra.mxu0 0
    %602 = vmatpush.bf16.msra.mxu0 %v590
    %603 = vmatpush.bf16.msra.mxu0 %v589
    %604 = vmatmul.bf16.gmra.mxu0 %v594
    %v605 = vpop.f32.mrf.mxu0
    %v606 = vadd.f32 %v580, %v605
    %v607 = vpop.f32.mrf.mxu0
    %v608 = vadd.f32 %v580, %v607
    %609 = vdwg.mxu0
    %v610 = vadd.f32 %v606, %v110
    %v611 = vadd.f32 %v608, %v111
    %v612 = vpack.c.bf16 %v611, %v610
    %v613 = vld [vmem:[%s7] sm:$0xf]
    %v614 = vld [vmem:[%s7 + $0x4] sm:$0xf]
    %v615 = vld [vmem:[%s7 + $0x8] sm:$0xf]
    %v616 = vld [vmem:[%s7 + $0xc] sm:$0xf]
    %v617 = vperm.slane %v65, 5
    %v622 = vunpack.c.l.b16 %v613
    %v623 = vunpack.c.l.b16 %v614
    %v624 = vunpack.c.l.b16 %v615
    %v625 = vunpack.c.l.b16 %v616
    %v626 = vpack.c.b16 %v623, %v622
    %v627 = vpack.c.b16 %v625, %v624
    %v631 = vsel %vm91, %v612, 0
    %633 = vmatpush.bf16.msra.mxu0 0
    %634 = vmatpush.bf16.msra.mxu0 0
    %635 = vmatpush.bf16.msra.mxu0 0
    %636 = vmatpush.bf16.msra.mxu0 0
    %637 = vmatpush.bf16.msra.mxu0 0
    %638 = vmatpush.bf16.msra.mxu0 0
    %639 = vmatpush.bf16.msra.mxu0 %v627
    %640 = vmatpush.bf16.msra.mxu0 %v626
    %641 = vmatmul.bf16.gmra.mxu0 %v631
    %v642 = vpop.f32.mrf.mxu0
    %v643 = vadd.f32 %v617, %v642
    %v644 = vpop.f32.mrf.mxu0
    %v645 = vadd.f32 %v617, %v644
    %646 = vdwg.mxu0
    %v647 = vunpack.c.l.bf16 %v66
    %v648 = vunpack.c.l.bf16 %v67
    %v649 = vadd.f32 %v643, %v647
    %v650 = vadd.f32 %v645, %v648
    %v651 = vsel %vm91, %v649, 0.0
    %652 = vadd.xlane.f32.xlu0 %v651
    %v653 = vpop.xlane.xlu0 %652
    %v654 = vsel %vm91, %v650, 0.0
    %655 = vadd.xlane.f32.xlu0 %v654
    %v656 = vpop.xlane.xlu0 %655
    %v657 = vrcp.pop 32.0
    %v658 = vmul.f32 32.0, %v657
    %v659 = vsub.f32 1.0, %v658
    %v660 = vmul.f32 %v657, %v659
    %v661 = vadd.f32 %v657, %v660
    %vm662 = vweird.f32 %v657
    %v663 = vsel %vm662, %v657, %v661
    %v664 = vmul.f32 %v653, %v663
    %v665 = vmul.f32 %v656, %v663
    %v666 = vsub.f32 %v649, %v664
    %v667 = vsub.f32 %v650, %v665
    %v668 = vmul.f32 %v666, %v666
    %v669 = vmul.f32 %v667, %v667
    %v670 = vsel %vm91, %v668, 0.0
    %671 = vadd.xlane.f32.xlu0 %v670
    %v672 = vpop.xlane.xlu0 %671
    %v673 = vsel %vm91, %v669, 0.0
    %674 = vadd.xlane.f32.xlu0 %v673
    %v675 = vpop.xlane.xlu0 %674
    %v676 = vmul.f32 %v672, %v663
    %v677 = vmul.f32 %v675, %v663
    %v678 = vadd.f32 %v676, 1e-12
    %v679 = vadd.f32 %v677, 1e-12
    %v680 = vrsqrt.pop %v678
    %v681 = vmul.f32 %v680, %v678
    %v682 = vmul.f32 %v681, %v680
    %v683 = vmul.f32 0.5, %v682
    %v684 = vsub.f32 1.5, %v683
    %v685 = vmul.f32 %v680, %v684
    %vm686 = vweird.f32 %v678
    %vm687 = vweird.f32 %v680
    %vm688 = vmor %vm686, %vm687
    %v689 = vsel %vm688, %v680, %v685
    %v690 = vrsqrt.pop %v679
    %v691 = vmul.f32 %v690, %v679
    %v692 = vmul.f32 %v691, %v690
    %v693 = vmul.f32 0.5, %v692
    %v694 = vsub.f32 1.5, %v693
    %v695 = vmul.f32 %v690, %v694
    %vm696 = vweird.f32 %v679
    %vm697 = vweird.f32 %v690
    %vm698 = vmor %vm696, %vm697
    %v699 = vsel %vm698, %v690, %v695
    %v700 = vmul.f32 %v666, %v689
    %v701 = vmul.f32 %v667, %v699
    %v702 = vperm.slane %v65, 6
    %v703 = vmul.f32 %v700, %v702
    %v704 = vmul.f32 %v701, %v702
    %v705 = vperm.slane %v65, 7
    %v706 = vadd.f32 %v703, %v705
    %v707 = vadd.f32 %v704, %v705
    %708 = vst.msk [vmem:[#allocation8] sm:$0xff] %vm91, %v706
    %709 = vst.msk [vmem:[#allocation8 + $0x8] sm:$0xff] %vm91, %v707
    // Predicated region
    $region46: #{tpu_custom_call.1} parent=1 // pred_check
      _
    $region47: #{tpu_custom_call.1} parent=1 // pred_check_branch
      %711 = sbr.rel (0) target = $region49
    $region48: #{tpu_custom_call.1} parent=1 // pred_region
      %713 = vsyncadd [#allocation5], 0
      %s714 = sshll.u32 [#allocation8], 4
      %s715 = int_to_ptr.vmem [resolvable:$true] %s714
      %s716 = sshll.u32 %s9, 4
      %s717 = int_to_ptr.hbm [resolvable:$true] %s716
      %722 = dma.vmem_to_hbm [thread:$0]  %s715, 256, %s717, [#allocation5], 128, 128, 8
    $region49: #{tpu_custom_call.1} parent=1 // pred_fallthru
      _
    // Predicated region
    $region50: #{tpu_custom_call.1} parent=1 // pred_check
      _
    $region51: #{tpu_custom_call.1} parent=1 // pred_check_branch
      %724 = sbr.rel (0) target = $region53
    $region52: #{tpu_custom_call.1} parent=1 // pred_region
      %726 = dma.done [#allocation5], 256
    $region53: #{tpu_custom_call.1} parent=1 // pred_fallthru
      _
    %727 = vsyncpa [#allocation4], 1
    %728 = vsyncpa [#allocation7], 1
    %729 = vsyncpa [#allocation5], 1

// kernel: tpu_custom_call.1
$region0: #{tpu_custom_call.1}
  #allocation0 [shape = 'u32[]', space=smem, size = 0x4, offset = 0x4, fixed_abs, tag = 'smem constant byte address 0x4 - core index']
  #allocation1 [shape = 'u32[72,128]{1,0:T(1,128)}', space=vmem, size = 0x9000, scoped, tag = 'internal scratch']
  #allocation2 [shape = 'f32[16,32]{1,0:T(8,128)}', space=vmem, size = 0x2000, scoped, tag = 'scratch operand']
  %s0 = inlined_call_operand.hbm [shape: bf16[16,32], index: 0, kind: input, shape index: {}]
  %s1 = inlined_call_operand.vmem [shape: f32[16,4], index: 1, kind: input, shape index: {}]
  %s2 = inlined_call_operand.hbm [shape: f32[4,32], index: 2, kind: input, shape index: {}]
  %s3 = inlined_call_operand.vmem [shape: bf16[32,64], index: 3, kind: input, shape index: {}]
  %s4 = inlined_call_operand.vmem [shape: bf16[32,4], index: 4, kind: input, shape index: {}]
  %s5 = inlined_call_operand.vmem [shape: bf16[32,4], index: 5, kind: input, shape index: {}]
  %s6 = inlined_call_operand.vmem [shape: bf16[32,32], index: 6, kind: input, shape index: {}]
  %s7 = inlined_call_operand.vmem [shape: bf16[32,32], index: 7, kind: input, shape index: {}]
  %s8 = inlined_call_operand.vmem [shape: f32[8,32], index: 8, kind: input, shape index: {}]
  %s9 = inlined_call_operand.hbm [shape: f32[16,32], index: 9, kind: output, shape index: {}]
  %s10 = sld [smem:[#allocation0]]
  $region54: #{tpu_custom_call.1} parent=0
    _
  %s12 = ssub.s32 1, %s10
  %s13 = scalar_select 0, %s12, %s10
  $region1: #{tpu_custom_call.1} parent=0
    #allocation3 [shape = 'u8[4096]{0}', space=vmem, size = 0x1000, scoped, tag = 'input window, operand 0, single buffered']
    #allocation4 [shape = 's32[1]{0}', space=sflag, size = 0x4, scoped, tag = 'scoped memory for tpu_custom_call.1']
    #allocation5 [shape = 's32[1]{0}', space=sflag, size = 0x4, scoped, tag = 'scoped memory for tpu_custom_call.1']
    #allocation6 [shape = 'u8[2048]{0}', space=vmem, size = 0x800, scoped, tag = 'input window, operand 2, single buffered']
    #allocation7 [shape = 's32[1]{0}', space=sflag, size = 0x4, scoped, tag = 'scoped memory for tpu_custom_call.1']
    #allocation8 [shape = 'u8[8192]{0}', space=vmem, size = 0x2000, scoped, tag = 'output window, operand 0, single buffered']
    %14 = vsyncpa [#allocation4], 0
    %15 = vsyncpa [#allocation7], 0
    %16 = vsyncpa [#allocation5], 0
    // Predicated region
    $region2: #{tpu_custom_call.1} parent=1 // pred_check
      _
    $region3: #{tpu_custom_call.1} parent=1 // pred_check_branch
      %18 = sbr.rel (0) target = $region5
    $region4: #{tpu_custom_call.1} parent=1 // pred_region
      %20 = vsyncadd [#allocation4], 0
      %s21 = sshll.u32 %s0, 4
      %s22 = int_to_ptr.hbm [resolvable:$true] %s21
      %s23 = sshll.u32 [#allocation3], 4
      %s24 = int_to_ptr.vmem [resolvable:$true] %s23
      %29 = dma.hbm_to_vmem [thread:$0]  %s22, 128, %s24, [#allocation4], 64, 64, 4
    $region5: #{tpu_custom_call.1} parent=1 // pred_fallthru
      _
    // Predicated region
    $region6: #{tpu_custom_call.1} parent=1 // pred_check
      _
    $region7: #{tpu_custom_call.1} parent=1 // pred_check_branch
      %31 = sbr.rel (0) target = $region9
    $region8: #{tpu_custom_call.1} parent=1 // pred_region
      _
    $region9: #{tpu_custom_call.1} parent=1 // pred_fallthru
      _
    // Predicated region
    $region10: #{tpu_custom_call.1} parent=1 // pred_check
      _
    $region11: #{tpu_custom_call.1} parent=1 // pred_check_branch
      %33 = sbr.rel (0) target = $region13
    $region12: #{tpu_custom_call.1} parent=1 // pred_region
      %35 = vsyncadd [#allocation7], 0
      %s37 = sshll.u32 %s2, 4
      %s38 = int_to_ptr.hbm [resolvable:$true] %s37
      %s39 = sshll.u32 [#allocation6], 4
      %s40 = int_to_ptr.vmem [resolvable:$true] %s39
      %42 = dma.hbm_to_vmem [thread:$0]  %s38, 64, %s40, [#allocation7]
    $region13: #{tpu_custom_call.1} parent=1 // pred_fallthru
      _
    // Predicated region
    $region14: #{tpu_custom_call.1} parent=1 // pred_check
      _
    $region15: #{tpu_custom_call.1} parent=1 // pred_check_branch
      %44 = sbr.rel (0) target = $region17
    $region16: #{tpu_custom_call.1} parent=1 // pred_region
      _
    $region17: #{tpu_custom_call.1} parent=1 // pred_fallthru
      _
    // Predicated region
    $region18: #{tpu_custom_call.1} parent=1 // pred_check
      _
    $region19: #{tpu_custom_call.1} parent=1 // pred_check_branch
      %46 = sbr.rel (0) target = $region21
    $region20: #{tpu_custom_call.1} parent=1 // pred_region
      _
    $region21: #{tpu_custom_call.1} parent=1 // pred_fallthru
      _
    // Predicated region
    $region22: #{tpu_custom_call.1} parent=1 // pred_check
      _
    $region23: #{tpu_custom_call.1} parent=1 // pred_check_branch
      %48 = sbr.rel (0) target = $region25
    $region24: #{tpu_custom_call.1} parent=1 // pred_region
      _
    $region25: #{tpu_custom_call.1} parent=1 // pred_fallthru
      _
    // Predicated region
    $region26: #{tpu_custom_call.1} parent=1 // pred_check
      _
    $region27: #{tpu_custom_call.1} parent=1 // pred_check_branch
      %50 = sbr.rel (0) target = $region29
    $region28: #{tpu_custom_call.1} parent=1 // pred_region
      _
    $region29: #{tpu_custom_call.1} parent=1 // pred_fallthru
      _
    // Predicated region
    $region30: #{tpu_custom_call.1} parent=1 // pred_check
      _
    $region31: #{tpu_custom_call.1} parent=1 // pred_check_branch
      %52 = sbr.rel (0) target = $region33
    $region32: #{tpu_custom_call.1} parent=1 // pred_region
      _
    $region33: #{tpu_custom_call.1} parent=1 // pred_fallthru
      _
    // Predicated region
    $region34: #{tpu_custom_call.1} parent=1 // pred_check
      _
    $region35: #{tpu_custom_call.1} parent=1 // pred_check_branch
      %54 = sbr.rel (0) target = $region37
    $region36: #{tpu_custom_call.1} parent=1 // pred_region
      _
    $region37: #{tpu_custom_call.1} parent=1 // pred_fallthru
      _
    // Predicated region
    $region38: #{tpu_custom_call.1} parent=1 // pred_check
      _
    $region39: #{tpu_custom_call.1} parent=1 // pred_check_branch
      %56 = sbr.rel (0) target = $region41
    $region40: #{tpu_custom_call.1} parent=1 // pred_region
      %58 = dma.done [#allocation4], 128
    $region41: #{tpu_custom_call.1} parent=1 // pred_fallthru
      _
    // Predicated region
    $region42: #{tpu_custom_call.1} parent=1 // pred_check
      _
    $region43: #{tpu_custom_call.1} parent=1 // pred_check_branch
      %60 = sbr.rel (0) target = $region45
    $region44: #{tpu_custom_call.1} parent=1 // pred_region
      %62 = dma.done [#allocation7], 64
    $region45: #{tpu_custom_call.1} parent=1 // pred_fallthru
      _
    %v64 = vld [vmem:[#allocation6] sm:$0xf]
    %v65 = vld [vmem:[%s8] sm:$0xff]
    %v66 = vld [vmem:[#allocation3] sm:$0xf]
    %v67 = vld [vmem:[#allocation3 + $0x4] sm:$0xf]
    %v68 = vld [vmem:[%s1] sm:$0xff]
    %v69 = vld [vmem:[%s1 + $0x8] sm:$0xff]
    %v70 = vld [vmem:[%s3] sm:$0xf]
    %v71 = vld [vmem:[%s3 + $0x4] sm:$0xf]
    %v72 = vld [vmem:[%s3 + $0x8] sm:$0xf]
    %v73 = vld [vmem:[%s3 + $0xc] sm:$0xf]
    %v76 = vunpack.c.l.b16 %v66
    %v77 = vunpack.c.l.b16 %v67
    %v78 = vpack.c.b16 %v77, %v76
    %v83 = vunpack.c.l.b16 %v70
    %v84 = vunpack.c.l.b16 %v71
    %v85 = vunpack.c.l.b16 %v72
    %v86 = vunpack.c.l.b16 %v73
    %v87 = vpack.c.b16 %v84, %v83
    %v88 = vpack.c.b16 %v86, %v85
    %vm91 = vcmask 261120
    %v93 = vsel %vm91, %v78, 0
    %95 = vmatpush.bf16.msra.mxu0 0
    %96 = vmatpush.bf16.msra.mxu0 0
    %97 = vmatpush.bf16.msra.mxu0 0
    %98 = vmatpush.bf16.msra.mxu0 0
    %99 = vmatpush.bf16.msra.mxu0 0
    %100 = vmatpush.bf16.msra.mxu0 0
    %101 = vmatpush.bf16.msra.mxu0 %v88
    %102 = vmatpush.bf16.msra.mxu0 %v87
    %103 = vmatmul.bf16.gmra.mxu0 %v93
    %v104 = vpop.f32.mrf.mxu0
    %v105 = vadd.f32 0.0, %v104
    %v106 = vpop.f32.mrf.mxu0
    %v107 = vadd.f32 0.0, %v106
    %108 = vdwg.mxu0
    %v109 = vperm.slane %v65, 0
    %v110 = vadd.f32 %v105, %v109
    %v111 = vadd.f32 %v107, %v109
    %v112 = vperm.slane %v65, 1
    %114 = vrot.lane.b32.xlu0 %v112, 32
    %v115 = vpop.permute.xlu0 %114
    %v117 = vadd.f32 %v105, %v115
    %v118 = vadd.f32 %v107, %v115
    %v119 = vpack.c.bf16 %v110, %v110
    %v120 = vpack.c.bf16 %v111, %v111
    %v121 = vld [vmem:[%s4] sm:$0xf]
    %v122 = vld [vmem:[%s4 + $0x4] sm:$0xf]
    %v123 = vld [vmem:[%s4 + $0x8] sm:$0xf]
    %v124 = vld [vmem:[%s4 + $0xc] sm:$0xf]
    %v125 = vperm.slane %v65, 2
    %v128 = vunpack.c.l.b16 %v119
    %v129 = vunpack.c.l.b16 %v120
    %v130 = vpack.c.b16 %v129, %v128
    %v135 = vunpack.c.l.b16 %v121
    %v136 = vunpack.c.l.b16 %v122
    %v137 = vunpack.c.l.b16 %v123
    %v138 = vunpack.c.l.b16 %v124
    %v139 = vpack.c.b16 %v136, %v135
    %v140 = vpack.c.b16 %v138, %v137
    %v144 = vsel %vm91, %v130, 0
    %146 = vmatpush.bf16.msra.mxu0 0
    %147 = vmatpush.bf16.msra.mxu0 0
    %148 = vmatpush.bf16.msra.mxu0 0
    %149 = vmatpush.bf16.msra.mxu0 0
    %150 = vmatpush.bf16.msra.mxu0 0
    %151 = vmatpush.bf16.msra.mxu0 0
    %152 = vmatpush.bf16.msra.mxu0 %v140
    %153 = vmatpush.bf16.msra.mxu0 %v139
    %154 = vmatmul.bf16.gmra.mxu0 %v144
    %v155 = vpop.f32.mrf.mxu0
    %v156 = vadd.f32 %v125, %v155
    %v157 = vpop.f32.mrf.mxu0
    %v158 = vadd.f32 %v125, %v157
    %159 = vdwg.mxu0
    %v160 = vmul.f32 %v156, 0.35355338
    %v161 = vmul.f32 %v158, 0.35355338
    %v162 = vadd.f32 %v160, %v68
    %v163 = vadd.f32 %v161, %v69
    %vm164 = vcmask 31744
    %v165 = vsel %vm164, %v162, -inf
    %v166 = vrot.slane %v165, 4
    %v167 = vmax.f32 %v165, %v166
    %v168 = vrot.slane %v167, 2
    %v169 = vmax.f32 %v167, %v168
    %v170 = vrot.slane %v169, 1
    %v171 = vmax.f32 %v169, %v170
    %v172 = vsub.f32 %v162, %v171
    %v173 = vmul.f32 %v172, 1.442695
    %v174 = vpow.pop %v173
    %v175 = vsel %vm164, %v174, 0.0
    %v176 = vrot.slane %v175, 4
    %v177 = vadd.f32 %v175, %v176
    %v178 = vrot.slane %v177, 2
    %v179 = vadd.f32 %v177, %v178
    %v180 = vrot.slane %v179, 1
    %v181 = vadd.f32 %v179, %v180
    %v182 = vrcp.pop %v181
    %v183 = vmul.f32 %v174, %v182
    %184 = vxpose.xlu0.b32.start [1/16] %v183, 128
    %185 = vxpose.xlu0.b32.cont [2/16] 0.0, 128
    %186 = vxpose.xlu0.b32.cont [3/16] 0.0, 128
    %187 = vxpose.xlu0.b32.cont [4/16] 0.0, 128
    %188 = vxpose.xlu0.b32.cont [5/16] 0.0, 128
    %189 = vxpose.xlu0.b32.cont [6/16] 0.0, 128
    %190 = vxpose.xlu0.b32.cont [7/16] 0.0, 128
    %191 = vxpose.xlu0.b32.cont [8/16] 0.0, 128
    %192 = vxpose.xlu0.b32.cont [9/16] 0.0, 128
    %193 = vxpose.xlu0.b32.cont [10/16] 0.0, 128
    %194 = vxpose.xlu0.b32.cont [11/16] 0.0, 128
    %195 = vxpose.xlu0.b32.cont [12/16] 0.0, 128
    %196 = vxpose.xlu0.b32.cont [13/16] 0.0, 128
    %197 = vxpose.xlu0.b32.cont [14/16] 0.0, 128
    %198 = vxpose.xlu0.b32.cont [15/16] 0.0, 128
    %199 = vxpose.xlu0.b32.end [16/16] 0.0, 128
    %v200 = vpop.trf.xlu0
    %v201 = vpop.trf.xlu0
    %v202 = vpop.trf.xlu0
    %v203 = vpop.trf.xlu0
    %v204 = vpop.trf.xlu0
    %v205 = vpop.trf.xlu0
    %v206 = vpop.trf.xlu0
    %v207 = vpop.trf.xlu0
    %v208 = vpop.trf.xlu0
    %v209 = vpop.trf.xlu0
    %v210 = vpop.trf.xlu0
    %v211 = vpop.trf.xlu0
    %v212 = vpop.trf.xlu0
    %v213 = vpop.trf.xlu0
    %v214 = vpop.trf.xlu0
    %v215 = vpop.trf.xlu0
    %v216 = vpack.c.bf16 %v200, %v200
    %vm217 = vcmask 64512
    %v219 = vsel %vm217, %v216, 0
    %vm221 = vcmask 1043456
    %v223 = vsel %vm221, %v119, 0
    %225 = vmatpush.bf16.msra.mxu0 0
    %226 = vmatpush.bf16.msra.mxu0 0
    %227 = vmatpush.bf16.msra.mxu0 0
    %228 = vmatpush.bf16.msra.mxu0 0
    %229 = vmatpush.bf16.msra.mxu0 0
    %230 = vmatpush.bf16.msra.mxu0 0
    %231 = vmatpush.bf16.msra.mxu0 0
    %232 = vmatpush.bf16.msra.mxu0 %v223
    %233 = vmatmul.bf16.gmra.mxu0 %v219
    %v234 = vpop.f32.mrf.mxu0
    %v235 = vadd.f32 0.0, %v234
    %v236 = vpop.f32.mrf.mxu0
    %237 = vdwg.mxu0
    %v238 = vmul.f32 %v235, %v64
    %vm239 = vcmask 257024
    %v240 = vsel %vm239, %v238, 0.0
    %v241 = vrot.slane %v240, 4
    %v242 = vadd.f32 %v240, %v241
    %v243 = vrot.slane %v242, 2
    %v244 = vadd.f32 %v242, %v243
    %v245 = vrot.slane %v244, 1
    %v246 = vadd.f32 %v244, %v245
    %248 = vrot.lane.b32.xlu0 %v246, 32
    %v249 = vpop.permute.xlu0 %248
    %v251 = vmul.f32 %v117, %v249
    %v252 = vpack.c.bf16 %v251, %v251
    %v253 = vld [vmem:[%s5] sm:$0xf]
    %v254 = vld [vmem:[%s5 + $0x4] sm:$0xf]
    %v255 = vld [vmem:[%s5 + $0x8] sm:$0xf]
    %v256 = vld [vmem:[%s5 + $0xc] sm:$0xf]
    %v257 = vperm.slane %v65, 3
    %259 = vrot.lane.b32.xlu0 %v252, 96
    %v260 = vpop.permute.xlu0 %259
    %v265 = vunpack.c.l.b16 %v253
    %v266 = vunpack.c.l.b16 %v254
    %v267 = vunpack.c.l.b16 %v255
    %v268 = vunpack.c.l.b16 %v256
    %v269 = vpack.c.b16 %v266, %v265
    %v270 = vpack.c.b16 %v268, %v267
    %v274 = vsel %vm91, %v260, 0
    %276 = vmatpush.bf16.msra.mxu0 0
    %277 = vmatpush.bf16.msra.mxu0 0
    %278 = vmatpush.bf16.msra.mxu0 0
    %279 = vmatpush.bf16.msra.mxu0 0
    %280 = vmatpush.bf16.msra.mxu0 0
    %281 = vmatpush.bf16.msra.mxu0 0
    %282 = vmatpush.bf16.msra.mxu0 %v270
    %283 = vmatpush.bf16.msra.mxu0 %v269
    %284 = vmatmul.bf16.gmra.mxu0 %v274
    %v285 = vpop.f32.mrf.mxu0
    %v286 = vadd.f32 %v257, %v285
    %v287 = vpop.f32.mrf.mxu0
    %288 = vdwg.mxu0
    %v289 = vmul.f32 %v286, 0.35355338
    %v290 = vadd.f32 %v289, %v68
    %v291 = vsel %vm164, %v290, -inf
    %v292 = vrot.slane %v291, 4
    %v293 = vmax.f32 %v291, %v292
    %v294 = vrot.slane %v293, 2
    %v295 = vmax.f32 %v293, %v294
    %v296 = vrot.slane %v295, 1
    %v297 = vmax.f32 %v295, %v296
    %v298 = vsub.f32 %v290, %v297
    %v299 = vmul.f32 %v298, 1.442695
    %v300 = vpow.pop %v299
    %v301 = vsel %vm164, %v300, 0.0
    %v302 = vrot.slane %v301, 4
    %v303 = vadd.f32 %v301, %v302
    %v304 = vrot.slane %v303, 2
    %v305 = vadd.f32 %v303, %v304
    %v306 = vrot.slane %v305, 1
    %v307 = vadd.f32 %v305, %v306
    %v308 = vrcp.pop %v307
    %v309 = vmul.f32 %v300, %v308
    %310 = vxpose.xlu0.b32.start [1/16] %v309, 128
    %311 = vxpose.xlu0.b32.cont [2/16] 0.0, 128
    %312 = vxpose.xlu0.b32.cont [3/16] 0.0, 128
    %313 = vxpose.xlu0.b32.cont [4/16] 0.0, 128
    %314 = vxpose.xlu0.b32.cont [5/16] 0.0, 128
    %315 = vxpose.xlu0.b32.cont [6/16] 0.0, 128
    %316 = vxpose.xlu0.b32.cont [7/16] 0.0, 128
    %317 = vxpose.xlu0.b32.cont [8/16] 0.0, 128
    %318 = vxpose.xlu0.b32.cont [9/16] 0.0, 128
    %319 = vxpose.xlu0.b32.cont [10/16] 0.0, 128
    %320 = vxpose.xlu0.b32.cont [11/16] 0.0, 128
    %321 = vxpose.xlu0.b32.cont [12/16] 0.0, 128
    %322 = vxpose.xlu0.b32.cont [13/16] 0.0, 128
    %323 = vxpose.xlu0.b32.cont [14/16] 0.0, 128
    %324 = vxpose.xlu0.b32.cont [15/16] 0.0, 128
    %325 = vxpose.xlu0.b32.end [16/16] 0.0, 128
    %v326 = vpop.trf.xlu0
    %v327 = vpop.trf.xlu0
    %v328 = vpop.trf.xlu0
    %v329 = vpop.trf.xlu0
    %v330 = vpop.trf.xlu0
    %v331 = vpop.trf.xlu0
    %v332 = vpop.trf.xlu0
    %v333 = vpop.trf.xlu0
    %v334 = vpop.trf.xlu0
    %v335 = vpop.trf.xlu0
    %v336 = vpop.trf.xlu0
    %v337 = vpop.trf.xlu0
    %v338 = vpop.trf.xlu0
    %v339 = vpop.trf.xlu0
    %v340 = vpop.trf.xlu0
    %v341 = vpop.trf.xlu0
    %v342 = vpack.c.bf16 %v326, %v326
    %v344 = vsel %vm217, %v342, 0
    %v346 = vsel %vm221, %v260, 0
    %348 = vmatpush.bf16.msra.mxu0 0
    %349 = vmatpush.bf16.msra.mxu0 0
    %350 = vmatpush.bf16.msra.mxu0 0
    %351 = vmatpush.bf16.msra.mxu0 0
    %352 = vmatpush.bf16.msra.mxu0 0
    %353 = vmatpush.bf16.msra.mxu0 0
    %354 = vmatpush.bf16.msra.mxu0 0
    %355 = vmatpush.bf16.msra.mxu0 %v346
    %356 = vmatmul.bf16.gmra.mxu0 %v344
    %v357 = vpop.f32.mrf.mxu0
    %v358 = vadd.f32 0.0, %v357
    %v359 = vpop.f32.mrf.mxu0
    %360 = vdwg.mxu0
    %v361 = vmul.f32 %v358, %v64
    %v362 = vsel %vm239, %v361, 0.0
    %v363 = vrot.slane %v362, 4
    %v364 = vadd.f32 %v362, %v363
    %v365 = vrot.slane %v364, 2
    %v366 = vadd.f32 %v364, %v365
    %v367 = vrot.slane %v366, 1
    %v368 = vadd.f32 %v366, %v367
    %v369 = vmul.f32 %v368, %v110
    %370 = vst.msk [vmem:[#allocation2] sm:$0xff] %vm91, %v369
    %v371 = vsel %vm164, %v163, -inf
    %v372 = vrot.slane %v371, 4
    %v373 = vmax.f32 %v371, %v372
    %v374 = vrot.slane %v373, 2
    %v375 = vmax.f32 %v373, %v374
    %v376 = vrot.slane %v375, 1
    %v377 = vmax.f32 %v375, %v376
    %v378 = vsub.f32 %v163, %v377
    %v379 = vmul.f32 %v378, 1.442695
    %v380 = vpow.pop %v379
    %v381 = vsel %vm164, %v380, 0.0
    %v382 = vrot.slane %v381, 4
    %v383 = vadd.f32 %v381, %v382
    %v384 = vrot.slane %v383, 2
    %v385 = vadd.f32 %v383, %v384
    %v386 = vrot.slane %v385, 1
    %v387 = vadd.f32 %v385, %v386
    %v388 = vrcp.pop %v387
    %v389 = vmul.f32 %v380, %v388
    %390 = vxpose.xlu0.b32.start [1/16] %v389, 128
    %391 = vxpose.xlu0.b32.cont [2/16] 0.0, 128
    %392 = vxpose.xlu0.b32.cont [3/16] 0.0, 128
    %393 = vxpose.xlu0.b32.cont [4/16] 0.0, 128
    %394 = vxpose.xlu0.b32.cont [5/16] 0.0, 128
    %395 = vxpose.xlu0.b32.cont [6/16] 0.0, 128
    %396 = vxpose.xlu0.b32.cont [7/16] 0.0, 128
    %397 = vxpose.xlu0.b32.cont [8/16] 0.0, 128
    %398 = vxpose.xlu0.b32.cont [9/16] 0.0, 128
    %399 = vxpose.xlu0.b32.cont [10/16] 0.0, 128
    %400 = vxpose.xlu0.b32.cont [11/16] 0.0, 128
    %401 = vxpose.xlu0.b32.cont [12/16] 0.0, 128
    %402 = vxpose.xlu0.b32.cont [13/16] 0.0, 128
    %403 = vxpose.xlu0.b32.cont [14/16] 0.0, 128
    %404 = vxpose.xlu0.b32.cont [15/16] 0.0, 128
    %405 = vxpose.xlu0.b32.end [16/16] 0.0, 128
    %v406 = vpop.trf.xlu0
    %v407 = vpop.trf.xlu0
    %v408 = vpop.trf.xlu0
    %v409 = vpop.trf.xlu0
    %v410 = vpop.trf.xlu0
    %v411 = vpop.trf.xlu0
    %v412 = vpop.trf.xlu0
    %v413 = vpop.trf.xlu0
    %v414 = vpop.trf.xlu0
    %v415 = vpop.trf.xlu0
    %v416 = vpop.trf.xlu0
    %v417 = vpop.trf.xlu0
    %v418 = vpop.trf.xlu0
    %v419 = vpop.trf.xlu0
    %v420 = vpop.trf.xlu0
    %v421 = vpop.trf.xlu0
    %v422 = vpack.c.bf16 %v406, %v406
    %v424 = vsel %vm217, %v422, 0
    %v427 = vsel %vm221, %v120, 0
    %429 = vmatpush.bf16.msra.mxu0 0
    %430 = vmatpush.bf16.msra.mxu0 0
    %431 = vmatpush.bf16.msra.mxu0 0
    %432 = vmatpush.bf16.msra.mxu0 0
    %433 = vmatpush.bf16.msra.mxu0 0
    %434 = vmatpush.bf16.msra.mxu0 0
    %435 = vmatpush.bf16.msra.mxu0 0
    %436 = vmatpush.bf16.msra.mxu0 %v427
    %437 = vmatmul.bf16.gmra.mxu0 %v424
    %v438 = vpop.f32.mrf.mxu0
    %v439 = vadd.f32 0.0, %v438
    %v440 = vpop.f32.mrf.mxu0
    %441 = vdwg.mxu0
    %v442 = vmul.f32 %v439, %v64
    %v443 = vsel %vm239, %v442, 0.0
    %v444 = vrot.slane %v443, 4
    %v445 = vadd.f32 %v443, %v444
    %v446 = vrot.slane %v445, 2
    %v447 = vadd.f32 %v445, %v446
    %v448 = vrot.slane %v447, 1
    %v449 = vadd.f32 %v447, %v448
    %451 = vrot.lane.b32.xlu0 %v449, 32
    %v452 = vpop.permute.xlu0 %451
    %v454 = vmul.f32 %v118, %v452
    %v455 = vpack.c.bf16 %v454, %v454
    %v456 = vld [vmem:[%s5] sm:$0xf]
    %v457 = vld [vmem:[%s5 + $0x4] sm:$0xf]
    %v458 = vld [vmem:[%s5 + $0x8] sm:$0xf]
    %v459 = vld [vmem:[%s5 + $0xc] sm:$0xf]
    %461 = vrot.lane.b32.xlu0 %v455, 96
    %v462 = vpop.permute.xlu0 %461
    %v467 = vunpack.c.l.b16 %v456
    %v468 = vunpack.c.l.b16 %v457
    %v469 = vunpack.c.l.b16 %v458
    %v470 = vunpack.c.l.b16 %v459
    %v471 = vpack.c.b16 %v468, %v467
    %v472 = vpack.c.b16 %v470, %v469
    %v476 = vsel %vm91, %v462, 0
    %478 = vmatpush.bf16.msra.mxu0 0
    %479 = vmatpush.bf16.msra.mxu0 0
    %480 = vmatpush.bf16.msra.mxu0 0
    %481 = vmatpush.bf16.msra.mxu0 0
    %482 = vmatpush.bf16.msra.mxu0 0
    %483 = vmatpush.bf16.msra.mxu0 0
    %484 = vmatpush.bf16.msra.mxu0 %v472
    %485 = vmatpush.bf16.msra.mxu0 %v471
    %486 = vmatmul.bf16.gmra.mxu0 %v476
    %v487 = vpop.f32.mrf.mxu0
    %v488 = vadd.f32 %v257, %v487
    %v489 = vpop.f32.mrf.mxu0
    %490 = vdwg.mxu0
    %v491 = vmul.f32 %v488, 0.35355338
    %v492 = vadd.f32 %v491, %v69
    %v493 = vsel %vm164, %v492, -inf
    %v494 = vrot.slane %v493, 4
    %v495 = vmax.f32 %v493, %v494
    %v496 = vrot.slane %v495, 2
    %v497 = vmax.f32 %v495, %v496
    %v498 = vrot.slane %v497, 1
    %v499 = vmax.f32 %v497, %v498
    %v500 = vsub.f32 %v492, %v499
    %v501 = vmul.f32 %v500, 1.442695
    %v502 = vpow.pop %v501
    %v503 = vsel %vm164, %v502, 0.0
    %v504 = vrot.slane %v503, 4
    %v505 = vadd.f32 %v503, %v504
    %v506 = vrot.slane %v505, 2
    %v507 = vadd.f32 %v505, %v506
    %v508 = vrot.slane %v507, 1
    %v509 = vadd.f32 %v507, %v508
    %v510 = vrcp.pop %v509
    %v511 = vmul.f32 %v502, %v510
    %512 = vxpose.xlu0.b32.start [1/16] %v511, 128
    %513 = vxpose.xlu0.b32.cont [2/16] 0.0, 128
    %514 = vxpose.xlu0.b32.cont [3/16] 0.0, 128
    %515 = vxpose.xlu0.b32.cont [4/16] 0.0, 128
    %516 = vxpose.xlu0.b32.cont [5/16] 0.0, 128
    %517 = vxpose.xlu0.b32.cont [6/16] 0.0, 128
    %518 = vxpose.xlu0.b32.cont [7/16] 0.0, 128
    %519 = vxpose.xlu0.b32.cont [8/16] 0.0, 128
    %520 = vxpose.xlu0.b32.cont [9/16] 0.0, 128
    %521 = vxpose.xlu0.b32.cont [10/16] 0.0, 128
    %522 = vxpose.xlu0.b32.cont [11/16] 0.0, 128
    %523 = vxpose.xlu0.b32.cont [12/16] 0.0, 128
    %524 = vxpose.xlu0.b32.cont [13/16] 0.0, 128
    %525 = vxpose.xlu0.b32.cont [14/16] 0.0, 128
    %526 = vxpose.xlu0.b32.cont [15/16] 0.0, 128
    %527 = vxpose.xlu0.b32.end [16/16] 0.0, 128
    %v528 = vpop.trf.xlu0
    %v529 = vpop.trf.xlu0
    %v530 = vpop.trf.xlu0
    %v531 = vpop.trf.xlu0
    %v532 = vpop.trf.xlu0
    %v533 = vpop.trf.xlu0
    %v534 = vpop.trf.xlu0
    %v535 = vpop.trf.xlu0
    %v536 = vpop.trf.xlu0
    %v537 = vpop.trf.xlu0
    %v538 = vpop.trf.xlu0
    %v539 = vpop.trf.xlu0
    %v540 = vpop.trf.xlu0
    %v541 = vpop.trf.xlu0
    %v542 = vpop.trf.xlu0
    %v543 = vpop.trf.xlu0
    %v544 = vpack.c.bf16 %v528, %v528
    %v546 = vsel %vm217, %v544, 0
    %v548 = vsel %vm221, %v462, 0
    %550 = vmatpush.bf16.msra.mxu0 0
    %551 = vmatpush.bf16.msra.mxu0 0
    %552 = vmatpush.bf16.msra.mxu0 0
    %553 = vmatpush.bf16.msra.mxu0 0
    %554 = vmatpush.bf16.msra.mxu0 0
    %555 = vmatpush.bf16.msra.mxu0 0
    %556 = vmatpush.bf16.msra.mxu0 0
    %557 = vmatpush.bf16.msra.mxu0 %v548
    %558 = vmatmul.bf16.gmra.mxu0 %v546
    %v559 = vpop.f32.mrf.mxu0
    %v560 = vadd.f32 0.0, %v559
    %v561 = vpop.f32.mrf.mxu0
    %562 = vdwg.mxu0
    %v563 = vmul.f32 %v560, %v64
    %v564 = vsel %vm239, %v563, 0.0
    %v565 = vrot.slane %v564, 4
    %v566 = vadd.f32 %v564, %v565
    %v567 = vrot.slane %v566, 2
    %v568 = vadd.f32 %v566, %v567
    %v569 = vrot.slane %v568, 1
    %v570 = vadd.f32 %v568, %v569
    %v571 = vmul.f32 %v570, %v111
    %572 = vst.msk [vmem:[#allocation2 + $0x8] sm:$0xff] %vm91, %v571
    %v573 = vld [vmem:[#allocation2] sm:$0xff]
    %v574 = vld [vmem:[#allocation2 + $0x8] sm:$0xff]
    %v575 = vpack.c.bf16 %v574, %v573
    %v576 = vld [vmem:[%s6] sm:$0xf]
    %v577 = vld [vmem:[%s6 + $0x4] sm:$0xf]
    %v578 = vld [vmem:[%s6 + $0x8] sm:$0xf]
    %v579 = vld [vmem:[%s6 + $0xc] sm:$0xf]
    %v580 = vperm.slane %v65, 4
    %v585 = vunpack.c.l.b16 %v576
    %v586 = vunpack.c.l.b16 %v577
    %v587 = vunpack.c.l.b16 %v578
    %v588 = vunpack.c.l.b16 %v579
    %v589 = vpack.c.b16 %v586, %v585
    %v590 = vpack.c.b16 %v588, %v587
    %v594 = vsel %vm91, %v575, 0
    %596 = vmatpush.bf16.msra.mxu0 0
    %597 = vmatpush.bf16.msra.mxu0 0
    %598 = vmatpush.bf16.msra.mxu0 0
    %599 = vmatpush.bf16.msra.mxu0 0
    %600 = vmatpush.bf16.msra.mxu0 0
    %601 = vmatpush.bf16.msra.mxu0 0
    %602 = vmatpush.bf16.msra.mxu0 %v590
    %603 = vmatpush.bf16.msra.mxu0 %v589
    %604 = vmatmul.bf16.gmra.mxu0 %v594
    %v605 = vpop.f32.mrf.mxu0
    %v606 = vadd.f32 %v580, %v605
    %v607 = vpop.f32.mrf.mxu0
    %v608 = vadd.f32 %v580, %v607
    %609 = vdwg.mxu0
    %v610 = vadd.f32 %v606, %v110
    %v611 = vadd.f32 %v608, %v111
    %v612 = vpack.c.bf16 %v611, %v610
    %v613 = vld [vmem:[%s7] sm:$0xf]
    %v614 = vld [vmem:[%s7 + $0x4] sm:$0xf]
    %v615 = vld [vmem:[%s7 + $0x8] sm:$0xf]
    %v616 = vld [vmem:[%s7 + $0xc] sm:$0xf]
    %v617 = vperm.slane %v65, 5
    %v622 = vunpack.c.l.b16 %v613
    %v623 = vunpack.c.l.b16 %v614
    %v624 = vunpack.c.l.b16 %v615
    %v625 = vunpack.c.l.b16 %v616
    %v626 = vpack.c.b16 %v623, %v622
    %v627 = vpack.c.b16 %v625, %v624
    %v631 = vsel %vm91, %v612, 0
    %633 = vmatpush.bf16.msra.mxu0 0
    %634 = vmatpush.bf16.msra.mxu0 0
    %635 = vmatpush.bf16.msra.mxu0 0
    %636 = vmatpush.bf16.msra.mxu0 0
    %637 = vmatpush.bf16.msra.mxu0 0
    %638 = vmatpush.bf16.msra.mxu0 0
    %639 = vmatpush.bf16.msra.mxu0 %v627
    %640 = vmatpush.bf16.msra.mxu0 %v626
    %641 = vmatmul.bf16.gmra.mxu0 %v631
    %v642 = vpop.f32.mrf.mxu0
    %v643 = vadd.f32 %v617, %v642
    %v644 = vpop.f32.mrf.mxu0
    %v645 = vadd.f32 %v617, %v644
    %646 = vdwg.mxu0
    %v647 = vunpack.c.l.bf16 %v66
    %v648 = vunpack.c.l.bf16 %v67
    %v649 = vadd.f32 %v643, %v647
    %v650 = vadd.f32 %v645, %v648
    %v651 = vsel %vm91, %v649, 0.0
    %652 = vadd.xlane.f32.xlu0 %v651
    %v653 = vpop.xlane.xlu0 %652
    %v654 = vsel %vm91, %v650, 0.0
    %655 = vadd.xlane.f32.xlu0 %v654
    %v656 = vpop.xlane.xlu0 %655
    %v657 = vrcp.pop 32.0
    %v658 = vmul.f32 32.0, %v657
    %v659 = vsub.f32 1.0, %v658
    %v660 = vmul.f32 %v657, %v659
    %v661 = vadd.f32 %v657, %v660
    %vm662 = vweird.f32 %v657
    %v663 = vsel %vm662, %v657, %v661
    %v664 = vmul.f32 %v653, %v663
    %v665 = vmul.f32 %v656, %v663
    %v666 = vsub.f32 %v649, %v664
    %v667 = vsub.f32 %v650, %v665
    %v668 = vmul.f32 %v666, %v666
    %v669 = vmul.f32 %v667, %v667
    %v670 = vsel %vm91, %v668, 0.0
    %671 = vadd.xlane.f32.xlu0 %v670
    %v672 = vpop.xlane.xlu0 %671
    %v673 = vsel %vm91, %v669, 0.0
    %674 = vadd.xlane.f32.xlu0 %v673
    %v675 = vpop.xlane.xlu0 %674
    %v676 = vmul.f32 %v672, %v663
    %v677 = vmul.f32 %v675, %v663
    %v678 = vadd.f32 %v676, 1e-12
    %v679 = vadd.f32 %v677, 1e-12
    %v680 = vrsqrt.pop %v678
    %v681 = vmul.f32 %v680, %v678
    %v682 = vmul.f32 %v681, %v680
    %v683 = vmul.f32 0.5, %v682
    %v684 = vsub.f32 1.5, %v683
    %v685 = vmul.f32 %v680, %v684
    %vm686 = vweird.f32 %v678
    %vm687 = vweird.f32 %v680
    %vm688 = vmor %vm686, %vm687
    %v689 = vsel %vm688, %v680, %v685
    %v690 = vrsqrt.pop %v679
    %v691 = vmul.f32 %v690, %v679
    %v692 = vmul.f32 %v691, %v690
    %v693 = vmul.f32 0.5, %v692
    %v694 = vsub.f32 1.5, %v693
    %v695 = vmul.f32 %v690, %v694
    %vm696 = vweird.f32 %v679
    %vm697 = vweird.f32 %v690
    %vm698 = vmor %vm696, %vm697
    %v699 = vsel %vm698, %v690, %v695
    %v700 = vmul.f32 %v666, %v689
    %v701 = vmul.f32 %v667, %v699
    %v702 = vperm.slane %v65, 6
    %v703 = vmul.f32 %v700, %v702
    %v704 = vmul.f32 %v701, %v702
    %v705 = vperm.slane %v65, 7
    %v706 = vadd.f32 %v703, %v705
    %v707 = vadd.f32 %v704, %v705
    %708 = vst.msk [vmem:[#allocation8] sm:$0xff] %vm91, %v706
    %709 = vst.msk [vmem:[#allocation8 + $0x8] sm:$0xff] %vm91, %v707
    // Predicated region
    $region46: #{tpu_custom_call.1} parent=1 // pred_check
      _
    $region47: #{tpu_custom_call.1} parent=1 // pred_check_branch
      %711 = sbr.rel (0) target = $region49
    $region48: #{tpu_custom_call.1} parent=1 // pred_region
      %713 = vsyncadd [#allocation5], 0
      %s714 = sshll.u32 [#allocation8], 4
      %s715 = int_to_ptr.vmem [resolvable:$true] %s714
      %s716 = sshll.u32 %s9, 4
      %s717 = int_to_ptr.hbm [resolvable:$true] %s716
      %722 = dma.vmem_to_hbm [thread:$0]  %s715, 256, %s717, [#allocation5], 128, 128, 8
    $region49: #{tpu_custom_call.1} parent=1 // pred_fallthru
      _
    // Predicated region
    $region50: #{tpu_custom_call.1} parent=1 // pred_check
      _
    $region51: #{tpu_custom_call.1} parent=1 // pred_check_branch
      %724 = sbr.rel (0) target = $region53
    $region52: #{tpu_custom_call.1} parent=1 // pred_region
      %726 = dma.done [#allocation5], 256
    $region53: #{tpu_custom_call.1} parent=1 // pred_fallthru
      _
    %727 = vsyncpa [#allocation4], 1
    %728 = vsyncpa [#allocation7], 1
    %729 = vsyncpa [#allocation5], 1

</llo_original>
